<compile_context>
chip_gen: v5e
topology: v5e:2x2
jax: 0.10.0
libtpu: 0.0.40
codegen_flags: <defaults>
</compile_context>

<pallas_src>
import functools

import jax
import jax.numpy as jnp
import numpy as np
from jax.experimental import pallas as pl
from jax.experimental.pallas import tpu as pltpu


def get_same_padding(kernel_size, dilation=1):
    return (kernel_size * dilation - dilation) // 2


def _round_up(x, m):
    return ((x + m - 1) // m) * m


# ----------------------------------------------------------------------------
# Kernels
# ----------------------------------------------------------------------------

def _grouped_conv_mxu_kernel(x_ref, w_ref, b_ref, o_ref, col_ref, *,
                             stride, groups, kernel_size, l_store, relu_slope):
    """General grouped Conv1d + bias + leaky_relu (batch folded into lanes).

    x_ref  : (S, C_in, L_in_lanes)  bf16 polyphase input; lane j = n*l_phase + t,
                                    x_ref[r, c, j] == x_pad[n, c, t*S + r]
    w_ref  : (C_out, K*C_in_g)      bf16 tap-fused weights (pre-cast on host)
    b_ref  : (C_out, 1)             f32
    o_ref  : (C_out, L_store)       bf16, L_store multiple of 128 (lane dense)
    col_ref: (K*C_in_g, L_store)    bf16 VMEM scratch (im2col, reused per group)
    """
    c_out, kcin = w_ref.shape
    c_in_g = kcin // kernel_size
    c_out_g = c_out // groups

    for g in range(groups):                      # static loop
        ci0 = g * c_in_g
        co0 = g * c_out_g
        # Stage the K tap slices at static row offsets in the VMEM scratch
        # (no jnp.concatenate temporaries), then one MXU matmul per group
        # with contraction depth K*C_in_g.
        for k in range(kernel_size):             # static loop over taps
            r = k % stride                       # polyphase: lane-shift only
            q = k // stride
            col_ref[k * c_in_g:(k + 1) * c_in_g, :] = (
                x_ref[r, ci0:ci0 + c_in_g, q:q + l_store])
        acc = jnp.dot(w_ref[co0:co0 + c_out_g, :], col_ref[...],
                      preferred_element_type=jnp.float32)
        # per-group f32 epilogue written straight into o_ref rows
        acc = acc + b_ref[co0:co0 + c_out_g, :]
        acc = jnp.where(acc >= 0, acc, relu_slope * acc)
        o_ref[co0:co0 + c_out_g, :] = acc.astype(o_ref.dtype)


def _conv_vpu_cin1_kernel(x_ref, w_ref, b_ref, o_ref, *,
                          stride, kernel_size, l_store, relu_slope):
    """Degenerate first layer (C_in == 1): VPU multiply-accumulate, no MXU.

    x_ref: (S, 1, L_in_lanes) bf16, w_ref: (C_out, K) f32, b_ref: (C_out, 1) f32
    o_ref: (C_out, L_store) bf16
    """
    c_out = w_ref.shape[0]
    w_all = w_ref[...]                                       # (C_out, K) f32
    acc = jnp.zeros((c_out, l_store), jnp.float32)
    for k in range(kernel_size):                             # static loop
        r = k % stride
        q = k // stride
        xk = x_ref[r, 0:1, q:q + l_store].astype(jnp.float32)    # (1, L)
        acc = acc + w_all[:, k:k + 1] * xk                        # (C_out, L)
    acc = acc + b_ref[...]
    acc = jnp.where(acc >= 0, acc, relu_slope * acc)
    o_ref[...] = acc.astype(o_ref.dtype)


def _conv_vpu_cout1_kernel(x_ref, w_ref, b_ref, o_ref, *,
                           stride, kernel_size, l_store, relu_slope):
    """Degenerate final layer (C_out == 1): VPU MAC + one sublane reduce.

    x_ref: (S, C_in, L_in_lanes) bf16, w_ref: (C_in, K) f32, b_ref: (1, 1) f32
    o_ref: (1, L_store) bf16
    """
    c_in = w_ref.shape[0]
    w_all = w_ref[...]                                       # (C_in, K) f32
    acc = jnp.zeros((c_in, l_store), jnp.float32)
    for k in range(kernel_size):                             # static loop
        r = k % stride
        q = k // stride
        acc = acc + w_all[:, k:k + 1] * x_ref[r, :, q:q + l_store].astype(jnp.float32)
    y = jnp.sum(acc, axis=0, keepdims=True) + b_ref[...]     # XLU sublane reduce
    y = jnp.where(y >= 0, y, relu_slope * y)
    o_ref[...] = y.astype(o_ref.dtype)


# ----------------------------------------------------------------------------
# Per-layer wrapper
# ----------------------------------------------------------------------------

def conv1d_wn_lrelu(x, w, b, *, stride, groups, padding, relu_slope,
                    storage_dtype=jnp.bfloat16):
    """Pallas-backed grouped Conv1d(+bias) + leaky_relu, NCL layout.

    The batch is folded into the lane axis, so the kernel runs grid-less with
    a lane-dense (multiple-of-128) output store and a single epilogue pass.
    """
    n, c_in, l_in = x.shape
    c_out, c_in_g, k = w.shape
    assert c_in == c_in_g * groups
    assert c_out % groups == 0

    s = stride
    l_pad = l_in + 2 * padding
    l_out = (l_pad - k) // s + 1
    q_max = (k - 1) // s
    l_phase = l_out + q_max
    right_pad = l_phase * s - l_in - padding
    assert right_pad >= 0, "padding too small for polyphase split"

    l_store = _round_up(n * l_phase, 128)          # lane-dense output width
    l_in_lanes = _round_up(l_store + q_max, 128)   # room for tap shifts

    # Host-side pad + polyphase split + batch fold (one fused XLA relayout,
    # bf16 on the wire):  x_flat[r, c, n*l_phase + t] = x_pad[n, c, t*s + r]
    x_p = jnp.pad(x, ((0, 0), (0, 0), (padding, right_pad)))
    x_flat = (x_p.reshape(n, c_in, l_phase, s)
                 .transpose(3, 1, 0, 2)
                 .reshape(s, c_in, n * l_phase))
    x_flat = jnp.pad(x_flat, ((0, 0), (0, 0), (0, l_in_lanes - n * l_phase)))
    x_flat = x_flat.astype(storage_dtype)

    b2 = b.reshape(c_out, 1).astype(jnp.float32)

    scratch_shapes = []
    if c_in == 1:
        # Degenerate first layer: the MXU would run a (C_out, K) x (K, L)
        # matmul -- dominated by weight pushes/FIFO pops.  Use the VPU.
        kernel = functools.partial(
            _conv_vpu_cin1_kernel, stride=s, kernel_size=k,
            l_store=l_store, relu_slope=relu_slope)
        w_arg = w[:, 0, :].astype(jnp.float32)                 # (C_out, K)
    elif c_out == 1:
        # Degenerate final layer: 1-row MXU matmul is pure overhead.  Use VPU.
        kernel = functools.partial(
            _conv_vpu_cout1_kernel, stride=s, kernel_size=k,
            l_store=l_store, relu_slope=relu_slope)
        w_arg = w[0].astype(jnp.float32)                       # (C_in, K)
    else:
        kernel = functools.partial(
            _grouped_conv_mxu_kernel, stride=s, groups=groups, kernel_size=k,
            l_store=l_store, relu_slope=relu_slope)
        # tap-fused weights, pre-cast to bf16 on the host (no in-kernel cast):
        #   w_arg[co, kk*c_in_g + ci] = w[co, ci, kk]
        w_arg = jnp.transpose(w, (0, 2, 1)).reshape(c_out, k * c_in_g)
        w_arg = w_arg.astype(storage_dtype)
        scratch_shapes = [pltpu.VMEM((k * c_in_g, l_store), storage_dtype)]

    itemsize = np.dtype(storage_dtype).itemsize
    flops = 2 * n * c_out * c_in_g * k * l_out
    bytes_accessed = (x_flat.size * x_flat.dtype.itemsize
                      + w_arg.size * w_arg.dtype.itemsize
                      + b2.size * 4
                      + c_out * l_store * itemsize)

    y_flat = pl.pallas_call(
        kernel,
        out_shape=jax.ShapeDtypeStruct((c_out, l_store), storage_dtype),
        scratch_shapes=scratch_shapes,
        cost_estimate=pl.CostEstimate(flops=flops, transcendentals=0,
                                      bytes_accessed=bytes_accessed),
    )(x_flat, w_arg, b2)

    # Back to NCL for fmap / next layer (bf16; one small XLA relayout).
    # TODO(synk): at production audio lengths add an L-tile "parallel" grid
    # axis (halo = q_max) sized for v7x's 64 MiB VMEM (>=2 parallel steps for
    # its 2 TensorCores), and emit the next layer's polyphase layout directly
    # from out_specs so this relayout and the HBM round trip disappear.
    y = y_flat[:, :n * l_phase].reshape(c_out, n, l_phase)[:, :, :l_out]
    return y.transpose(1, 0, 2)                    # (N, C_out, L_out)


# ----------------------------------------------------------------------------
# Module
# ----------------------------------------------------------------------------

class SubMSDPallas:
    """JAX/Pallas re-implementation of SubMSD.forward."""

    def __init__(self, filter_counts, kernel_sizes, strides, groups,
                 relu_slope=0.2, key=None, storage_dtype=jnp.bfloat16):
        assert len(filter_counts) == len(kernel_sizes) == len(strides) == len(groups)
        self.relu_slope = relu_slope
        self.storage_dtype = storage_dtype
        self.layers = []  # list of (w, b, stride, groups, padding), params in f32
        key = jax.random.PRNGKey(0) if key is None else key

        for i in range(len(filter_counts)):
            in_filters = 1 if i == 0 else filter_counts[i - 1]
            out_filters = filter_counts[i]
            k = kernel_sizes[i]
            g = groups[i]
            padding = get_same_padding(k)
            key, wk, bk = jax.random.split(key, 3)
            w = 0.1 * jax.random.normal(wk, (out_filters, in_filters // g, k), jnp.float32)
            b = 0.1 * jax.random.normal(bk, (out_filters,), jnp.float32)
            self.layers.append((w, b, strides[i], g, padding))

        # final conv: Conv1d(filter_counts[-1], 1, 3, padding=1)
        key, wk, bk = jax.random.split(key, 3)
        w = 0.1 * jax.random.normal(wk, (1, filter_counts[-1], 3), jnp.float32)
        b = 0.1 * jax.random.normal(bk, (1,), jnp.float32)
        self.layers.append((w, b, 1, 1, 1))

    def __call__(self, x):
        fmap = []
        for (w, b, stride, groups, padding) in self.layers:
            x = conv1d_wn_lrelu(x, w, b, stride=stride, groups=groups,
                                padding=padding, relu_slope=self.relu_slope,
                                storage_dtype=self.storage_dtype)
            fmap.append(x)
        return jnp.squeeze(x, axis=1), fmap


def _reference_forward(x, layers, relu_slope):
    """Pure-JAX (XLA conv, f32) reference for numerical sanity checking."""
    fmap = []
    for (w, b, stride, groups, padding) in layers:
        y = jax.lax.conv_general_dilated(
            x, w, window_strides=(stride,), padding=[(padding, padding)],
            dimension_numbers=("NCH", "OIH", "NCH"),
            feature_group_count=groups)
        y = y + b[None, :, None]
        x = jnp.where(y >= 0, y, relu_slope * y)
        fmap.append(x)
    return jnp.squeeze(x, axis=1), fmap


def _to_np_f32(a):
    return np.asarray(jnp.asarray(a, jnp.float32))


if __name__ == "__main__":
    # Small deterministic config (HiFi-GAN MSD-like, scaled down).
    filter_counts = [4, 8, 8]
    kernel_sizes = [15, 5, 5]
    strides = [1, 2, 2]
    groups = [1, 2, 4]

    model = SubMSDPallas(filter_counts, kernel_sizes, strides, groups,
                         relu_slope=0.2, key=jax.random.PRNGKey(0))

    # Input: (N=2, C=1, L=64) — first conv expects 1 input channel.
    x = jax.random.normal(jax.random.PRNGKey(0), (2, 1, 64), jnp.float32)

    forward = jax.jit(model.__call__)
    out, fmap = forward(x)
    out = jax.block_until_ready(out)
    for f in fmap:
        jax.block_until_ready(f)

    # Shapes implied by the module.
    assert out.shape == (2, 16)           # (N, L_final) after squeeze(1)
    assert len(fmap) == len(filter_counts) + 1
    assert fmap[0].shape == (2, 4, 64)
    assert fmap[1].shape == (2, 8, 32)
    assert fmap[2].shape == (2, 8, 16)
    assert fmap[3].shape == (2, 1, 16)

    # Numerical sanity vs a pure-XLA f32 reference (bf16 wire => loose tol).
    ref_out, ref_fmap = _reference_forward(x, model.layers, model.relu_slope)
    np.testing.assert_allclose(_to_np_f32(out), _to_np_f32(ref_out),
                               atol=5e-2, rtol=5e-2)
    for f, rf in zip(fmap, ref_fmap):
        np.testing.assert_allclose(_to_np_f32(f), _to_np_f32(rf),
                                   atol=5e-2, rtol=5e-2)

    print("KERNEL_OK")
</pallas_src>

<mosaic_0001>
module attributes {stable_mosaic.version = 11 : i64} {
  func.func @_conv_vpu_cin1_kernel(%arg0: memref<1x1x384xbf16, #tpu.memory_space<vmem>>, %arg1: memref<4x15xf32, #tpu.memory_space<vmem>>, %arg2: memref<4x1xf32, #tpu.memory_space<vmem>>, %arg3: memref<4x256xbf16, #tpu.memory_space<vmem>>) attributes {dimension_semantics = [], scalar_prefetch = 0 : i64, scratch_operands = 0 : i64, tpu.core_type = #tpu.core_type<tc>} {
    %c0 = arith.constant 0 : index
    %c0_0 = arith.constant 0 : index
    %0 = vector.load %arg1[%c0, %c0_0] : memref<4x15xf32, #tpu.memory_space<vmem>>, vector<4x15xf32>
    %cst = arith.constant 0.000000e+00 : f32
    %1 = vector.broadcast %cst : f32 to vector<4x256xf32>
    %c0_1 = arith.constant 0 : index
    %c0_2 = arith.constant 0 : index
    %c0_3 = arith.constant 0 : index
    %2 = vector.load %arg0[%c0_1, %c0_2, %c0_3] : memref<1x1x384xbf16, #tpu.memory_space<vmem>>, vector<1x1x256xbf16>
    %3 = vector.shape_cast %2 : vector<1x1x256xbf16> to vector<1x256xbf16>
    %4 = arith.extf %3 : vector<1x256xbf16> to vector<1x256xf32>
    %5 = vector.extract_strided_slice %0 {offsets = [0, 0], sizes = [4, 1], strides = [1, 1]} : vector<4x15xf32> to vector<4x1xf32>
    %6 = vector.broadcast %5 : vector<4x1xf32> to vector<4x256xf32>
    %7 = vector.broadcast %4 : vector<1x256xf32> to vector<4x256xf32>
    %8 = arith.mulf %6, %7 : vector<4x256xf32>
    %9 = arith.addf %1, %8 : vector<4x256xf32>
    %c0_4 = arith.constant 0 : index
    %c0_5 = arith.constant 0 : index
    %c1 = arith.constant 1 : index
    %10 = vector.load %arg0[%c0_4, %c0_5, %c1] : memref<1x1x384xbf16, #tpu.memory_space<vmem>>, vector<1x1x256xbf16>
    %11 = vector.shape_cast %10 : vector<1x1x256xbf16> to vector<1x256xbf16>
    %12 = arith.extf %11 : vector<1x256xbf16> to vector<1x256xf32>
    %13 = vector.extract_strided_slice %0 {offsets = [0, 1], sizes = [4, 1], strides = [1, 1]} : vector<4x15xf32> to vector<4x1xf32>
    %14 = vector.broadcast %13 : vector<4x1xf32> to vector<4x256xf32>
    %15 = vector.broadcast %12 : vector<1x256xf32> to vector<4x256xf32>
    %16 = arith.mulf %14, %15 : vector<4x256xf32>
    %17 = arith.addf %9, %16 : vector<4x256xf32>
    %c0_6 = arith.constant 0 : index
    %c0_7 = arith.constant 0 : index
    %c2 = arith.constant 2 : index
    %18 = vector.load %arg0[%c0_6, %c0_7, %c2] : memref<1x1x384xbf16, #tpu.memory_space<vmem>>, vector<1x1x256xbf16>
    %19 = vector.shape_cast %18 : vector<1x1x256xbf16> to vector<1x256xbf16>
    %20 = arith.extf %19 : vector<1x256xbf16> to vector<1x256xf32>
    %21 = vector.extract_strided_slice %0 {offsets = [0, 2], sizes = [4, 1], strides = [1, 1]} : vector<4x15xf32> to vector<4x1xf32>
    %22 = vector.broadcast %21 : vector<4x1xf32> to vector<4x256xf32>
    %23 = vector.broadcast %20 : vector<1x256xf32> to vector<4x256xf32>
    %24 = arith.mulf %22, %23 : vector<4x256xf32>
    %25 = arith.addf %17, %24 : vector<4x256xf32>
    %c0_8 = arith.constant 0 : index
    %c0_9 = arith.constant 0 : index
    %c3 = arith.constant 3 : index
    %26 = vector.load %arg0[%c0_8, %c0_9, %c3] : memref<1x1x384xbf16, #tpu.memory_space<vmem>>, vector<1x1x256xbf16>
    %27 = vector.shape_cast %26 : vector<1x1x256xbf16> to vector<1x256xbf16>
    %28 = arith.extf %27 : vector<1x256xbf16> to vector<1x256xf32>
    %29 = vector.extract_strided_slice %0 {offsets = [0, 3], sizes = [4, 1], strides = [1, 1]} : vector<4x15xf32> to vector<4x1xf32>
    %30 = vector.broadcast %29 : vector<4x1xf32> to vector<4x256xf32>
    %31 = vector.broadcast %28 : vector<1x256xf32> to vector<4x256xf32>
    %32 = arith.mulf %30, %31 : vector<4x256xf32>
    %33 = arith.addf %25, %32 : vector<4x256xf32>
    %c0_10 = arith.constant 0 : index
    %c0_11 = arith.constant 0 : index
    %c4 = arith.constant 4 : index
    %34 = vector.load %arg0[%c0_10, %c0_11, %c4] : memref<1x1x384xbf16, #tpu.memory_space<vmem>>, vector<1x1x256xbf16>
    %35 = vector.shape_cast %34 : vector<1x1x256xbf16> to vector<1x256xbf16>
    %36 = arith.extf %35 : vector<1x256xbf16> to vector<1x256xf32>
    %37 = vector.extract_strided_slice %0 {offsets = [0, 4], sizes = [4, 1], strides = [1, 1]} : vector<4x15xf32> to vector<4x1xf32>
    %38 = vector.broadcast %37 : vector<4x1xf32> to vector<4x256xf32>
    %39 = vector.broadcast %36 : vector<1x256xf32> to vector<4x256xf32>
    %40 = arith.mulf %38, %39 : vector<4x256xf32>
    %41 = arith.addf %33, %40 : vector<4x256xf32>
    %c0_12 = arith.constant 0 : index
    %c0_13 = arith.constant 0 : index
    %c5 = arith.constant 5 : index
    %42 = vector.load %arg0[%c0_12, %c0_13, %c5] : memref<1x1x384xbf16, #tpu.memory_space<vmem>>, vector<1x1x256xbf16>
    %43 = vector.shape_cast %42 : vector<1x1x256xbf16> to vector<1x256xbf16>
    %44 = arith.extf %43 : vector<1x256xbf16> to vector<1x256xf32>
    %45 = vector.extract_strided_slice %0 {offsets = [0, 5], sizes = [4, 1], strides = [1, 1]} : vector<4x15xf32> to vector<4x1xf32>
    %46 = vector.broadcast %45 : vector<4x1xf32> to vector<4x256xf32>
    %47 = vector.broadcast %44 : vector<1x256xf32> to vector<4x256xf32>
    %48 = arith.mulf %46, %47 : vector<4x256xf32>
    %49 = arith.addf %41, %48 : vector<4x256xf32>
    %c0_14 = arith.constant 0 : index
    %c0_15 = arith.constant 0 : index
    %c6 = arith.constant 6 : index
    %50 = vector.load %arg0[%c0_14, %c0_15, %c6] : memref<1x1x384xbf16, #tpu.memory_space<vmem>>, vector<1x1x256xbf16>
    %51 = vector.shape_cast %50 : vector<1x1x256xbf16> to vector<1x256xbf16>
    %52 = arith.extf %51 : vector<1x256xbf16> to vector<1x256xf32>
    %53 = vector.extract_strided_slice %0 {offsets = [0, 6], sizes = [4, 1], strides = [1, 1]} : vector<4x15xf32> to vector<4x1xf32>
    %54 = vector.broadcast %53 : vector<4x1xf32> to vector<4x256xf32>
    %55 = vector.broadcast %52 : vector<1x256xf32> to vector<4x256xf32>
    %56 = arith.mulf %54, %55 : vector<4x256xf32>
    %57 = arith.addf %49, %56 : vector<4x256xf32>
    %c0_16 = arith.constant 0 : index
    %c0_17 = arith.constant 0 : index
    %c7 = arith.constant 7 : index
    %58 = vector.load %arg0[%c0_16, %c0_17, %c7] : memref<1x1x384xbf16, #tpu.memory_space<vmem>>, vector<1x1x256xbf16>
    %59 = vector.shape_cast %58 : vector<1x1x256xbf16> to vector<1x256xbf16>
    %60 = arith.extf %59 : vector<1x256xbf16> to vector<1x256xf32>
    %61 = vector.extract_strided_slice %0 {offsets = [0, 7], sizes = [4, 1], strides = [1, 1]} : vector<4x15xf32> to vector<4x1xf32>
    %62 = vector.broadcast %61 : vector<4x1xf32> to vector<4x256xf32>
    %63 = vector.broadcast %60 : vector<1x256xf32> to vector<4x256xf32>
    %64 = arith.mulf %62, %63 : vector<4x256xf32>
    %65 = arith.addf %57, %64 : vector<4x256xf32>
    %c0_18 = arith.constant 0 : index
    %c0_19 = arith.constant 0 : index
    %c8 = arith.constant 8 : index
    %66 = vector.load %arg0[%c0_18, %c0_19, %c8] : memref<1x1x384xbf16, #tpu.memory_space<vmem>>, vector<1x1x256xbf16>
    %67 = vector.shape_cast %66 : vector<1x1x256xbf16> to vector<1x256xbf16>
    %68 = arith.extf %67 : vector<1x256xbf16> to vector<1x256xf32>
    %69 = vector.extract_strided_slice %0 {offsets = [0, 8], sizes = [4, 1], strides = [1, 1]} : vector<4x15xf32> to vector<4x1xf32>
    %70 = vector.broadcast %69 : vector<4x1xf32> to vector<4x256xf32>
    %71 = vector.broadcast %68 : vector<1x256xf32> to vector<4x256xf32>
    %72 = arith.mulf %70, %71 : vector<4x256xf32>
    %73 = arith.addf %65, %72 : vector<4x256xf32>
    %c0_20 = arith.constant 0 : index
    %c0_21 = arith.constant 0 : index
    %c9 = arith.constant 9 : index
    %74 = vector.load %arg0[%c0_20, %c0_21, %c9] : memref<1x1x384xbf16, #tpu.memory_space<vmem>>, vector<1x1x256xbf16>
    %75 = vector.shape_cast %74 : vector<1x1x256xbf16> to vector<1x256xbf16>
    %76 = arith.extf %75 : vector<1x256xbf16> to vector<1x256xf32>
    %77 = vector.extract_strided_slice %0 {offsets = [0, 9], sizes = [4, 1], strides = [1, 1]} : vector<4x15xf32> to vector<4x1xf32>
    %78 = vector.broadcast %77 : vector<4x1xf32> to vector<4x256xf32>
    %79 = vector.broadcast %76 : vector<1x256xf32> to vector<4x256xf32>
    %80 = arith.mulf %78, %79 : vector<4x256xf32>
    %81 = arith.addf %73, %80 : vector<4x256xf32>
    %c0_22 = arith.constant 0 : index
    %c0_23 = arith.constant 0 : index
    %c10 = arith.constant 10 : index
    %82 = vector.load %arg0[%c0_22, %c0_23, %c10] : memref<1x1x384xbf16, #tpu.memory_space<vmem>>, vector<1x1x256xbf16>
    %83 = vector.shape_cast %82 : vector<1x1x256xbf16> to vector<1x256xbf16>
    %84 = arith.extf %83 : vector<1x256xbf16> to vector<1x256xf32>
    %85 = vector.extract_strided_slice %0 {offsets = [0, 10], sizes = [4, 1], strides = [1, 1]} : vector<4x15xf32> to vector<4x1xf32>
    %86 = vector.broadcast %85 : vector<4x1xf32> to vector<4x256xf32>
    %87 = vector.broadcast %84 : vector<1x256xf32> to vector<4x256xf32>
    %88 = arith.mulf %86, %87 : vector<4x256xf32>
    %89 = arith.addf %81, %88 : vector<4x256xf32>
    %c0_24 = arith.constant 0 : index
    %c0_25 = arith.constant 0 : index
    %c11 = arith.constant 11 : index
    %90 = vector.load %arg0[%c0_24, %c0_25, %c11] : memref<1x1x384xbf16, #tpu.memory_space<vmem>>, vector<1x1x256xbf16>
    %91 = vector.shape_cast %90 : vector<1x1x256xbf16> to vector<1x256xbf16>
    %92 = arith.extf %91 : vector<1x256xbf16> to vector<1x256xf32>
    %93 = vector.extract_strided_slice %0 {offsets = [0, 11], sizes = [4, 1], strides = [1, 1]} : vector<4x15xf32> to vector<4x1xf32>
    %94 = vector.broadcast %93 : vector<4x1xf32> to vector<4x256xf32>
    %95 = vector.broadcast %92 : vector<1x256xf32> to vector<4x256xf32>
    %96 = arith.mulf %94, %95 : vector<4x256xf32>
    %97 = arith.addf %89, %96 : vector<4x256xf32>
    %c0_26 = arith.constant 0 : index
    %c0_27 = arith.constant 0 : index
    %c12 = arith.constant 12 : index
    %98 = vector.load %arg0[%c0_26, %c0_27, %c12] : memref<1x1x384xbf16, #tpu.memory_space<vmem>>, vector<1x1x256xbf16>
    %99 = vector.shape_cast %98 : vector<1x1x256xbf16> to vector<1x256xbf16>
    %100 = arith.extf %99 : vector<1x256xbf16> to vector<1x256xf32>
    %101 = vector.extract_strided_slice %0 {offsets = [0, 12], sizes = [4, 1], strides = [1, 1]} : vector<4x15xf32> to vector<4x1xf32>
    %102 = vector.broadcast %101 : vector<4x1xf32> to vector<4x256xf32>
    %103 = vector.broadcast %100 : vector<1x256xf32> to vector<4x256xf32>
    %104 = arith.mulf %102, %103 : vector<4x256xf32>
    %105 = arith.addf %97, %104 : vector<4x256xf32>
    %c0_28 = arith.constant 0 : index
    %c0_29 = arith.constant 0 : index
    %c13 = arith.constant 13 : index
    %106 = vector.load %arg0[%c0_28, %c0_29, %c13] : memref<1x1x384xbf16, #tpu.memory_space<vmem>>, vector<1x1x256xbf16>
    %107 = vector.shape_cast %106 : vector<1x1x256xbf16> to vector<1x256xbf16>
    %108 = arith.extf %107 : vector<1x256xbf16> to vector<1x256xf32>
    %109 = vector.extract_strided_slice %0 {offsets = [0, 13], sizes = [4, 1], strides = [1, 1]} : vector<4x15xf32> to vector<4x1xf32>
    %110 = vector.broadcast %109 : vector<4x1xf32> to vector<4x256xf32>
    %111 = vector.broadcast %108 : vector<1x256xf32> to vector<4x256xf32>
    %112 = arith.mulf %110, %111 : vector<4x256xf32>
    %113 = arith.addf %105, %112 : vector<4x256xf32>
    %c0_30 = arith.constant 0 : index
    %c0_31 = arith.constant 0 : index
    %c14 = arith.constant 14 : index
    %114 = vector.load %arg0[%c0_30, %c0_31, %c14] : memref<1x1x384xbf16, #tpu.memory_space<vmem>>, vector<1x1x256xbf16>
    %115 = vector.shape_cast %114 : vector<1x1x256xbf16> to vector<1x256xbf16>
    %116 = arith.extf %115 : vector<1x256xbf16> to vector<1x256xf32>
    %117 = vector.extract_strided_slice %0 {offsets = [0, 14], sizes = [4, 1], strides = [1, 1]} : vector<4x15xf32> to vector<4x1xf32>
    %118 = vector.broadcast %117 : vector<4x1xf32> to vector<4x256xf32>
    %119 = vector.broadcast %116 : vector<1x256xf32> to vector<4x256xf32>
    %120 = arith.mulf %118, %119 : vector<4x256xf32>
    %121 = arith.addf %113, %120 : vector<4x256xf32>
    %c0_32 = arith.constant 0 : index
    %c0_33 = arith.constant 0 : index
    %122 = vector.load %arg2[%c0_32, %c0_33] : memref<4x1xf32, #tpu.memory_space<vmem>>, vector<4x1xf32>
    %123 = vector.broadcast %122 : vector<4x1xf32> to vector<4x256xf32>
    %124 = arith.addf %121, %123 : vector<4x256xf32>
    %cst_34 = arith.constant 0.000000e+00 : f32
    %125 = vector.broadcast %cst_34 : f32 to vector<4x256xf32>
    %126 = arith.cmpf oge, %124, %125 : vector<4x256xf32>
    %cst_35 = arith.constant 2.000000e-01 : f32
    %127 = vector.broadcast %cst_35 : f32 to vector<4x256xf32>
    %128 = arith.mulf %127, %124 : vector<4x256xf32>
    %129 = arith.select %126, %124, %128 : vector<4x256xi1>, vector<4x256xf32>
    %130 = arith.truncf %129 : vector<4x256xf32> to vector<4x256xbf16>
    %c0_36 = arith.constant 0 : index
    %c0_37 = arith.constant 0 : index
    %131 = vector.load %arg3[%c0_36, %c0_37] : memref<4x256xbf16, #tpu.memory_space<vmem>>, vector<4x256xbf16>
    tpu.vector_store %arg3[%c0_36, %c0_37], %130 {strides = array<i32>} : memref<4x256xbf16, #tpu.memory_space<vmem>>, vector<4x256xbf16>,
    return
  }
}

module attributes {stable_mosaic.version = 11 : i64} {
  func.func @_grouped_conv_mxu_kernel(%arg0: memref<2x4x256xbf16, #tpu.memory_space<vmem>>, %arg1: memref<8x10xbf16, #tpu.memory_space<vmem>>, %arg2: memref<8x1xf32, #tpu.memory_space<vmem>>, %arg3: memref<8x128xbf16, #tpu.memory_space<vmem>>, %arg4: memref<10x128xbf16, #tpu.memory_space<vmem>>) attributes {dimension_semantics = [], scalar_prefetch = 0 : i64, scratch_operands = 1 : i64, tpu.core_type = #tpu.core_type<tc>} {
    %c0 = arith.constant 0 : index
    %c0_0 = arith.constant 0 : index
    %c0_1 = arith.constant 0 : index
    %0 = vector.load %arg0[%c0, %c0_0, %c0_1] : memref<2x4x256xbf16, #tpu.memory_space<vmem>>, vector<1x2x128xbf16>
    %1 = vector.shape_cast %0 : vector<1x2x128xbf16> to vector<2x128xbf16>
    %c0_2 = arith.constant 0 : index
    %c0_3 = arith.constant 0 : index
    %2 = vector.load %arg4[%c0_2, %c0_3] : memref<10x128xbf16, #tpu.memory_space<vmem>>, vector<2x128xbf16>
    tpu.vector_store %arg4[%c0_2, %c0_3], %1 {strides = array<i32>} : memref<10x128xbf16, #tpu.memory_space<vmem>>, vector<2x128xbf16>,
    %c1 = arith.constant 1 : index
    %c0_4 = arith.constant 0 : index
    %c0_5 = arith.constant 0 : index
    %3 = vector.load %arg0[%c1, %c0_4, %c0_5] : memref<2x4x256xbf16, #tpu.memory_space<vmem>>, vector<1x2x128xbf16>
    %4 = vector.shape_cast %3 : vector<1x2x128xbf16> to vector<2x128xbf16>
    %c2 = arith.constant 2 : index
    %c0_6 = arith.constant 0 : index
    %5 = vector.load %arg4[%c2, %c0_6] : memref<10x128xbf16, #tpu.memory_space<vmem>>, vector<2x128xbf16>
    tpu.vector_store %arg4[%c2, %c0_6], %4 {strides = array<i32>} : memref<10x128xbf16, #tpu.memory_space<vmem>>, vector<2x128xbf16>,
    %c0_7 = arith.constant 0 : index
    %c0_8 = arith.constant 0 : index
    %c1_9 = arith.constant 1 : index
    %6 = vector.load %arg0[%c0_7, %c0_8, %c1_9] : memref<2x4x256xbf16, #tpu.memory_space<vmem>>, vector<1x2x128xbf16>
    %7 = vector.shape_cast %6 : vector<1x2x128xbf16> to vector<2x128xbf16>
    %c4 = arith.constant 4 : index
    %c0_10 = arith.constant 0 : index
    %8 = vector.load %arg4[%c4, %c0_10] : memref<10x128xbf16, #tpu.memory_space<vmem>>, vector<2x128xbf16>
    tpu.vector_store %arg4[%c4, %c0_10], %7 {strides = array<i32>} : memref<10x128xbf16, #tpu.memory_space<vmem>>, vector<2x128xbf16>,
    %c1_11 = arith.constant 1 : index
    %c0_12 = arith.constant 0 : index
    %c1_13 = arith.constant 1 : index
    %9 = vector.load %arg0[%c1_11, %c0_12, %c1_13] : memref<2x4x256xbf16, #tpu.memory_space<vmem>>, vector<1x2x128xbf16>
    %10 = vector.shape_cast %9 : vector<1x2x128xbf16> to vector<2x128xbf16>
    %c6 = arith.constant 6 : index
    %c0_14 = arith.constant 0 : index
    %11 = vector.load %arg4[%c6, %c0_14] : memref<10x128xbf16, #tpu.memory_space<vmem>>, vector<2x128xbf16>
    tpu.vector_store %arg4[%c6, %c0_14], %10 {strides = array<i32>} : memref<10x128xbf16, #tpu.memory_space<vmem>>, vector<2x128xbf16>,
    %c0_15 = arith.constant 0 : index
    %c0_16 = arith.constant 0 : index
    %c2_17 = arith.constant 2 : index
    %12 = vector.load %arg0[%c0_15, %c0_16, %c2_17] : memref<2x4x256xbf16, #tpu.memory_space<vmem>>, vector<1x2x128xbf16>
    %13 = vector.shape_cast %12 : vector<1x2x128xbf16> to vector<2x128xbf16>
    %c8 = arith.constant 8 : index
    %c0_18 = arith.constant 0 : index
    %14 = vector.load %arg4[%c8, %c0_18] : memref<10x128xbf16, #tpu.memory_space<vmem>>, vector<2x128xbf16>
    tpu.vector_store %arg4[%c8, %c0_18], %13 {strides = array<i32>} : memref<10x128xbf16, #tpu.memory_space<vmem>>, vector<2x128xbf16>,
    %c0_19 = arith.constant 0 : index
    %c0_20 = arith.constant 0 : index
    %15 = vector.load %arg1[%c0_19, %c0_20] : memref<8x10xbf16, #tpu.memory_space<vmem>>, vector<4x10xbf16>
    %c0_21 = arith.constant 0 : index
    %c0_22 = arith.constant 0 : index
    %16 = vector.load %arg4[%c0_21, %c0_22] : memref<10x128xbf16, #tpu.memory_space<vmem>>, vector<10x128xbf16>
    %cst = arith.constant dense<0.000000e+00> : vector<4x128xf32>
    %17 = tpu.matmul %15, %16, %cst {dimension_numbers = #tpu.dot_dimension_numbers<[1], [0], [0], [1], [0, 0, 1, 1], [], []>} : vector<4x10xbf16>, vector<10x128xbf16>, vector<4x128xf32> -> vector<4x128xf32>
    %c0_23 = arith.constant 0 : index
    %c0_24 = arith.constant 0 : index
    %18 = vector.load %arg2[%c0_23, %c0_24] : memref<8x1xf32, #tpu.memory_space<vmem>>, vector<4x1xf32>
    %19 = vector.broadcast %18 : vector<4x1xf32> to vector<4x128xf32>
    %20 = arith.addf %17, %19 : vector<4x128xf32>
    %cst_25 = arith.constant 0.000000e+00 : f32
    %21 = vector.broadcast %cst_25 : f32 to vector<4x128xf32>
    %22 = arith.cmpf oge, %20, %21 : vector<4x128xf32>
    %cst_26 = arith.constant 2.000000e-01 : f32
    %23 = vector.broadcast %cst_26 : f32 to vector<4x128xf32>
    %24 = arith.mulf %23, %20 : vector<4x128xf32>
    %25 = arith.select %22, %20, %24 : vector<4x128xi1>, vector<4x128xf32>
    %26 = arith.truncf %25 : vector<4x128xf32> to vector<4x128xbf16>
    %c0_27 = arith.constant 0 : index
    %c0_28 = arith.constant 0 : index
    %27 = vector.load %arg3[%c0_27, %c0_28] : memref<8x128xbf16, #tpu.memory_space<vmem>>, vector<4x128xbf16>
    tpu.vector_store %arg3[%c0_27, %c0_28], %26 {strides = array<i32>} : memref<8x128xbf16, #tpu.memory_space<vmem>>, vector<4x128xbf16>,
    %c0_29 = arith.constant 0 : index
    %c2_30 = arith.constant 2 : index
    %c0_31 = arith.constant 0 : index
    %28 = vector.load %arg0[%c0_29, %c2_30, %c0_31] : memref<2x4x256xbf16, #tpu.memory_space<vmem>>, vector<1x2x128xbf16>
    %29 = vector.shape_cast %28 : vector<1x2x128xbf16> to vector<2x128xbf16>
    %c0_32 = arith.constant 0 : index
    %c0_33 = arith.constant 0 : index
    %30 = vector.load %arg4[%c0_32, %c0_33] : memref<10x128xbf16, #tpu.memory_space<vmem>>, vector<2x128xbf16>
    tpu.vector_store %arg4[%c0_32, %c0_33], %29 {strides = array<i32>} : memref<10x128xbf16, #tpu.memory_space<vmem>>, vector<2x128xbf16>,
    %c1_34 = arith.constant 1 : index
    %c2_35 = arith.constant 2 : index
    %c0_36 = arith.constant 0 : index
    %31 = vector.load %arg0[%c1_34, %c2_35, %c0_36] : memref<2x4x256xbf16, #tpu.memory_space<vmem>>, vector<1x2x128xbf16>
    %32 = vector.shape_cast %31 : vector<1x2x128xbf16> to vector<2x128xbf16>
    %c2_37 = arith.constant 2 : index
    %c0_38 = arith.constant 0 : index
    %33 = vector.load %arg4[%c2_37, %c0_38] : memref<10x128xbf16, #tpu.memory_space<vmem>>, vector<2x128xbf16>
    tpu.vector_store %arg4[%c2_37, %c0_38], %32 {strides = array<i32>} : memref<10x128xbf16, #tpu.memory_space<vmem>>, vector<2x128xbf16>,
    %c0_39 = arith.constant 0 : index
    %c2_40 = arith.constant 2 : index
    %c1_41 = arith.constant 1 : index
    %34 = vector.load %arg0[%c0_39, %c2_40, %c1_41] : memref<2x4x256xbf16, #tpu.memory_space<vmem>>, vector<1x2x128xbf16>
    %35 = vector.shape_cast %34 : vector<1x2x128xbf16> to vector<2x128xbf16>
    %c4_42 = arith.constant 4 : index
    %c0_43 = arith.constant 0 : index
    %36 = vector.load %arg4[%c4_42, %c0_43] : memref<10x128xbf16, #tpu.memory_space<vmem>>, vector<2x128xbf16>
    tpu.vector_store %arg4[%c4_42, %c0_43], %35 {strides = array<i32>} : memref<10x128xbf16, #tpu.memory_space<vmem>>, vector<2x128xbf16>,
    %c1_44 = arith.constant 1 : index
    %c2_45 = arith.constant 2 : index
    %c1_46 = arith.constant 1 : index
    %37 = vector.load %arg0[%c1_44, %c2_45, %c1_46] : memref<2x4x256xbf16, #tpu.memory_space<vmem>>, vector<1x2x128xbf16>
    %38 = vector.shape_cast %37 : vector<1x2x128xbf16> to vector<2x128xbf16>
    %c6_47 = arith.constant 6 : index
    %c0_48 = arith.constant 0 : index
    %39 = vector.load %arg4[%c6_47, %c0_48] : memref<10x128xbf16, #tpu.memory_space<vmem>>, vector<2x128xbf16>
    tpu.vector_store %arg4[%c6_47, %c0_48], %38 {strides = array<i32>} : memref<10x128xbf16, #tpu.memory_space<vmem>>, vector<2x128xbf16>,
    %c0_49 = arith.constant 0 : index
    %c2_50 = arith.constant 2 : index
    %c2_51 = arith.constant 2 : index
    %40 = vector.load %arg0[%c0_49, %c2_50, %c2_51] : memref<2x4x256xbf16, #tpu.memory_space<vmem>>, vector<1x2x128xbf16>
    %41 = vector.shape_cast %40 : vector<1x2x128xbf16> to vector<2x128xbf16>
    %c8_52 = arith.constant 8 : index
    %c0_53 = arith.constant 0 : index
    %42 = vector.load %arg4[%c8_52, %c0_53] : memref<10x128xbf16, #tpu.memory_space<vmem>>, vector<2x128xbf16>
    tpu.vector_store %arg4[%c8_52, %c0_53], %41 {strides = array<i32>} : memref<10x128xbf16, #tpu.memory_space<vmem>>, vector<2x128xbf16>,
    %c4_54 = arith.constant 4 : index
    %c0_55 = arith.constant 0 : index
    %43 = vector.load %arg1[%c4_54, %c0_55] : memref<8x10xbf16, #tpu.memory_space<vmem>>, vector<4x10xbf16>
    %c0_56 = arith.constant 0 : index
    %c0_57 = arith.constant 0 : index
    %44 = vector.load %arg4[%c0_56, %c0_57] : memref<10x128xbf16, #tpu.memory_space<vmem>>, vector<10x128xbf16>
    %cst_58 = arith.constant dense<0.000000e+00> : vector<4x128xf32>
    %45 = tpu.matmul %43, %44, %cst_58 {dimension_numbers = #tpu.dot_dimension_numbers<[1], [0], [0], [1], [0, 0, 1, 1], [], []>} : vector<4x10xbf16>, vector<10x128xbf16>, vector<4x128xf32> -> vector<4x128xf32>
    %c4_59 = arith.constant 4 : index
    %c0_60 = arith.constant 0 : index
    %46 = vector.load %arg2[%c4_59, %c0_60] : memref<8x1xf32, #tpu.memory_space<vmem>>, vector<4x1xf32>
    %47 = vector.broadcast %46 : vector<4x1xf32> to vector<4x128xf32>
    %48 = arith.addf %45, %47 : vector<4x128xf32>
    %cst_61 = arith.constant 0.000000e+00 : f32
    %49 = vector.broadcast %cst_61 : f32 to vector<4x128xf32>
    %50 = arith.cmpf oge, %48, %49 : vector<4x128xf32>
    %cst_62 = arith.constant 2.000000e-01 : f32
    %51 = vector.broadcast %cst_62 : f32 to vector<4x128xf32>
    %52 = arith.mulf %51, %48 : vector<4x128xf32>
    %53 = arith.select %50, %48, %52 : vector<4x128xi1>, vector<4x128xf32>
    %54 = arith.truncf %53 : vector<4x128xf32> to vector<4x128xbf16>
    %c4_63 = arith.constant 4 : index
    %c0_64 = arith.constant 0 : index
    %55 = vector.load %arg3[%c4_63, %c0_64] : memref<8x128xbf16, #tpu.memory_space<vmem>>, vector<4x128xbf16>
    tpu.vector_store %arg3[%c4_63, %c0_64], %54 {strides = array<i32>} : memref<8x128xbf16, #tpu.memory_space<vmem>>, vector<4x128xbf16>,
    return
  }
}

module attributes {stable_mosaic.version = 11 : i64} {
  func.func @_grouped_conv_mxu_kernel(%arg0: memref<2x8x256xbf16, #tpu.memory_space<vmem>>, %arg1: memref<8x10xbf16, #tpu.memory_space<vmem>>, %arg2: memref<8x1xf32, #tpu.memory_space<vmem>>, %arg3: memref<8x128xbf16, #tpu.memory_space<vmem>>, %arg4: memref<10x128xbf16, #tpu.memory_space<vmem>>) attributes {dimension_semantics = [], scalar_prefetch = 0 : i64, scratch_operands = 1 : i64, tpu.core_type = #tpu.core_type<tc>} {
    %c0 = arith.constant 0 : index
    %c0_0 = arith.constant 0 : index
    %c0_1 = arith.constant 0 : index
    %0 = vector.load %arg0[%c0, %c0_0, %c0_1] : memref<2x8x256xbf16, #tpu.memory_space<vmem>>, vector<1x2x128xbf16>
    %1 = vector.shape_cast %0 : vector<1x2x128xbf16> to vector<2x128xbf16>
    %c0_2 = arith.constant 0 : index
    %c0_3 = arith.constant 0 : index
    %2 = vector.load %arg4[%c0_2, %c0_3] : memref<10x128xbf16, #tpu.memory_space<vmem>>, vector<2x128xbf16>
    tpu.vector_store %arg4[%c0_2, %c0_3], %1 {strides = array<i32>} : memref<10x128xbf16, #tpu.memory_space<vmem>>, vector<2x128xbf16>,
    %c1 = arith.constant 1 : index
    %c0_4 = arith.constant 0 : index
    %c0_5 = arith.constant 0 : index
    %3 = vector.load %arg0[%c1, %c0_4, %c0_5] : memref<2x8x256xbf16, #tpu.memory_space<vmem>>, vector<1x2x128xbf16>
    %4 = vector.shape_cast %3 : vector<1x2x128xbf16> to vector<2x128xbf16>
    %c2 = arith.constant 2 : index
    %c0_6 = arith.constant 0 : index
    %5 = vector.load %arg4[%c2, %c0_6] : memref<10x128xbf16, #tpu.memory_space<vmem>>, vector<2x128xbf16>
    tpu.vector_store %arg4[%c2, %c0_6], %4 {strides = array<i32>} : memref<10x128xbf16, #tpu.memory_space<vmem>>, vector<2x128xbf16>,
    %c0_7 = arith.constant 0 : index
    %c0_8 = arith.constant 0 : index
    %c1_9 = arith.constant 1 : index
    %6 = vector.load %arg0[%c0_7, %c0_8, %c1_9] : memref<2x8x256xbf16, #tpu.memory_space<vmem>>, vector<1x2x128xbf16>
    %7 = vector.shape_cast %6 : vector<1x2x128xbf16> to vector<2x128xbf16>
    %c4 = arith.constant 4 : index
    %c0_10 = arith.constant 0 : index
    %8 = vector.load %arg4[%c4, %c0_10] : memref<10x128xbf16, #tpu.memory_space<vmem>>, vector<2x128xbf16>
    tpu.vector_store %arg4[%c4, %c0_10], %7 {strides = array<i32>} : memref<10x128xbf16, #tpu.memory_space<vmem>>, vector<2x128xbf16>,
    %c1_11 = arith.constant 1 : index
    %c0_12 = arith.constant 0 : index
    %c1_13 = arith.constant 1 : index
    %9 = vector.load %arg0[%c1_11, %c0_12, %c1_13] : memref<2x8x256xbf16, #tpu.memory_space<vmem>>, vector<1x2x128xbf16>
    %10 = vector.shape_cast %9 : vector<1x2x128xbf16> to vector<2x128xbf16>
    %c6 = arith.constant 6 : index
    %c0_14 = arith.constant 0 : index
    %11 = vector.load %arg4[%c6, %c0_14] : memref<10x128xbf16, #tpu.memory_space<vmem>>, vector<2x128xbf16>
    tpu.vector_store %arg4[%c6, %c0_14], %10 {strides = array<i32>} : memref<10x128xbf16, #tpu.memory_space<vmem>>, vector<2x128xbf16>,
    %c0_15 = arith.constant 0 : index
    %c0_16 = arith.constant 0 : index
    %c2_17 = arith.constant 2 : index
    %12 = vector.load %arg0[%c0_15, %c0_16, %c2_17] : memref<2x8x256xbf16, #tpu.memory_space<vmem>>, vector<1x2x128xbf16>
    %13 = vector.shape_cast %12 : vector<1x2x128xbf16> to vector<2x128xbf16>
    %c8 = arith.constant 8 : index
    %c0_18 = arith.constant 0 : index
    %14 = vector.load %arg4[%c8, %c0_18] : memref<10x128xbf16, #tpu.memory_space<vmem>>, vector<2x128xbf16>
    tpu.vector_store %arg4[%c8, %c0_18], %13 {strides = array<i32>} : memref<10x128xbf16, #tpu.memory_space<vmem>>, vector<2x128xbf16>,
    %c0_19 = arith.constant 0 : index
    %c0_20 = arith.constant 0 : index
    %15 = vector.load %arg1[%c0_19, %c0_20] : memref<8x10xbf16, #tpu.memory_space<vmem>>, vector<2x10xbf16>
    %c0_21 = arith.constant 0 : index
    %c0_22 = arith.constant 0 : index
    %16 = vector.load %arg4[%c0_21, %c0_22] : memref<10x128xbf16, #tpu.memory_space<vmem>>, vector<10x128xbf16>
    %cst = arith.constant dense<0.000000e+00> : vector<2x128xf32>
    %17 = tpu.matmul %15, %16, %cst {dimension_numbers = #tpu.dot_dimension_numbers<[1], [0], [0], [1], [0, 0, 1, 1], [], []>} : vector<2x10xbf16>, vector<10x128xbf16>, vector<2x128xf32> -> vector<2x128xf32>
    %c0_23 = arith.constant 0 : index
    %c0_24 = arith.constant 0 : index
    %18 = vector.load %arg2[%c0_23, %c0_24] : memref<8x1xf32, #tpu.memory_space<vmem>>, vector<2x1xf32>
    %19 = vector.broadcast %18 : vector<2x1xf32> to vector<2x128xf32>
    %20 = arith.addf %17, %19 : vector<2x128xf32>
    %cst_25 = arith.constant 0.000000e+00 : f32
    %21 = vector.broadcast %cst_25 : f32 to vector<2x128xf32>
    %22 = arith.cmpf oge, %20, %21 : vector<2x128xf32>
    %cst_26 = arith.constant 2.000000e-01 : f32
    %23 = vector.broadcast %cst_26 : f32 to vector<2x128xf32>
    %24 = arith.mulf %23, %20 : vector<2x128xf32>
    %25 = arith.select %22, %20, %24 : vector<2x128xi1>, vector<2x128xf32>
    %26 = arith.truncf %25 : vector<2x128xf32> to vector<2x128xbf16>
    %c0_27 = arith.constant 0 : index
    %c0_28 = arith.constant 0 : index
    %27 = vector.load %arg3[%c0_27, %c0_28] : memref<8x128xbf16, #tpu.memory_space<vmem>>, vector<2x128xbf16>
    tpu.vector_store %arg3[%c0_27, %c0_28], %26 {strides = array<i32>} : memref<8x128xbf16, #tpu.memory_space<vmem>>, vector<2x128xbf16>,
    %c0_29 = arith.constant 0 : index
    %c2_30 = arith.constant 2 : index
    %c0_31 = arith.constant 0 : index
    %28 = vector.load %arg0[%c0_29, %c2_30, %c0_31] : memref<2x8x256xbf16, #tpu.memory_space<vmem>>, vector<1x2x128xbf16>
    %29 = vector.shape_cast %28 : vector<1x2x128xbf16> to vector<2x128xbf16>
    %c0_32 = arith.constant 0 : index
    %c0_33 = arith.constant 0 : index
    %30 = vector.load %arg4[%c0_32, %c0_33] : memref<10x128xbf16, #tpu.memory_space<vmem>>, vector<2x128xbf16>
    tpu.vector_store %arg4[%c0_32, %c0_33], %29 {strides = array<i32>} : memref<10x128xbf16, #tpu.memory_space<vmem>>, vector<2x128xbf16>,
    %c1_34 = arith.constant 1 : index
    %c2_35 = arith.constant 2 : index
    %c0_36 = arith.constant 0 : index
    %31 = vector.load %arg0[%c1_34, %c2_35, %c0_36] : memref<2x8x256xbf16, #tpu.memory_space<vmem>>, vector<1x2x128xbf16>
    %32 = vector.shape_cast %31 : vector<1x2x128xbf16> to vector<2x128xbf16>
    %c2_37 = arith.constant 2 : index
    %c0_38 = arith.constant 0 : index
    %33 = vector.load %arg4[%c2_37, %c0_38] : memref<10x128xbf16, #tpu.memory_space<vmem>>, vector<2x128xbf16>
    tpu.vector_store %arg4[%c2_37, %c0_38], %32 {strides = array<i32>} : memref<10x128xbf16, #tpu.memory_space<vmem>>, vector<2x128xbf16>,
    %c0_39 = arith.constant 0 : index
    %c2_40 = arith.constant 2 : index
    %c1_41 = arith.constant 1 : index
    %34 = vector.load %arg0[%c0_39, %c2_40, %c1_41] : memref<2x8x256xbf16, #tpu.memory_space<vmem>>, vector<1x2x128xbf16>
    %35 = vector.shape_cast %34 : vector<1x2x128xbf16> to vector<2x128xbf16>
    %c4_42 = arith.constant 4 : index
    %c0_43 = arith.constant 0 : index
    %36 = vector.load %arg4[%c4_42, %c0_43] : memref<10x128xbf16, #tpu.memory_space<vmem>>, vector<2x128xbf16>
    tpu.vector_store %arg4[%c4_42, %c0_43], %35 {strides = array<i32>} : memref<10x128xbf16, #tpu.memory_space<vmem>>, vector<2x128xbf16>,
    %c1_44 = arith.constant 1 : index
    %c2_45 = arith.constant 2 : index
    %c1_46 = arith.constant 1 : index
    %37 = vector.load %arg0[%c1_44, %c2_45, %c1_46] : memref<2x8x256xbf16, #tpu.memory_space<vmem>>, vector<1x2x128xbf16>
    %38 = vector.shape_cast %37 : vector<1x2x128xbf16> to vector<2x128xbf16>
    %c6_47 = arith.constant 6 : index
    %c0_48 = arith.constant 0 : index
    %39 = vector.load %arg4[%c6_47, %c0_48] : memref<10x128xbf16, #tpu.memory_space<vmem>>, vector<2x128xbf16>
    tpu.vector_store %arg4[%c6_47, %c0_48], %38 {strides = array<i32>} : memref<10x128xbf16, #tpu.memory_space<vmem>>, vector<2x128xbf16>,
    %c0_49 = arith.constant 0 : index
    %c2_50 = arith.constant 2 : index
    %c2_51 = arith.constant 2 : index
    %40 = vector.load %arg0[%c0_49, %c2_50, %c2_51] : memref<2x8x256xbf16, #tpu.memory_space<vmem>>, vector<1x2x128xbf16>
    %41 = vector.shape_cast %40 : vector<1x2x128xbf16> to vector<2x128xbf16>
    %c8_52 = arith.constant 8 : index
    %c0_53 = arith.constant 0 : index
    %42 = vector.load %arg4[%c8_52, %c0_53] : memref<10x128xbf16, #tpu.memory_space<vmem>>, vector<2x128xbf16>
    tpu.vector_store %arg4[%c8_52, %c0_53], %41 {strides = array<i32>} : memref<10x128xbf16, #tpu.memory_space<vmem>>, vector<2x128xbf16>,
    %c2_54 = arith.constant 2 : index
    %c0_55 = arith.constant 0 : index
    %43 = vector.load %arg1[%c2_54, %c0_55] : memref<8x10xbf16, #tpu.memory_space<vmem>>, vector<2x10xbf16>
    %c0_56 = arith.constant 0 : index
    %c0_57 = arith.constant 0 : index
    %44 = vector.load %arg4[%c0_56, %c0_57] : memref<10x128xbf16, #tpu.memory_space<vmem>>, vector<10x128xbf16>
    %cst_58 = arith.constant dense<0.000000e+00> : vector<2x128xf32>
    %45 = tpu.matmul %43, %44, %cst_58 {dimension_numbers = #tpu.dot_dimension_numbers<[1], [0], [0], [1], [0, 0, 1, 1], [], []>} : vector<2x10xbf16>, vector<10x128xbf16>, vector<2x128xf32> -> vector<2x128xf32>
    %c2_59 = arith.constant 2 : index
    %c0_60 = arith.constant 0 : index
    %46 = vector.load %arg2[%c2_59, %c0_60] : memref<8x1xf32, #tpu.memory_space<vmem>>, vector<2x1xf32>
    %47 = vector.broadcast %46 : vector<2x1xf32> to vector<2x128xf32>
    %48 = arith.addf %45, %47 : vector<2x128xf32>
    %cst_61 = arith.constant 0.000000e+00 : f32
    %49 = vector.broadcast %cst_61 : f32 to vector<2x128xf32>
    %50 = arith.cmpf oge, %48, %49 : vector<2x128xf32>
    %cst_62 = arith.constant 2.000000e-01 : f32
    %51 = vector.broadcast %cst_62 : f32 to vector<2x128xf32>
    %52 = arith.mulf %51, %48 : vector<2x128xf32>
    %53 = arith.select %50, %48, %52 : vector<2x128xi1>, vector<2x128xf32>
    %54 = arith.truncf %53 : vector<2x128xf32> to vector<2x128xbf16>
    %c2_63 = arith.constant 2 : index
    %c0_64 = arith.constant 0 : index
    %55 = vector.load %arg3[%c2_63, %c0_64] : memref<8x128xbf16, #tpu.memory_space<vmem>>, vector<2x128xbf16>
    tpu.vector_store %arg3[%c2_63, %c0_64], %54 {strides = array<i32>} : memref<8x128xbf16, #tpu.memory_space<vmem>>, vector<2x128xbf16>,
    %c0_65 = arith.constant 0 : index
    %c4_66 = arith.constant 4 : index
    %c0_67 = arith.constant 0 : index
    %56 = vector.load %arg0[%c0_65, %c4_66, %c0_67] : memref<2x8x256xbf16, #tpu.memory_space<vmem>>, vector<1x2x128xbf16>
    %57 = vector.shape_cast %56 : vector<1x2x128xbf16> to vector<2x128xbf16>
    %c0_68 = arith.constant 0 : index
    %c0_69 = arith.constant 0 : index
    %58 = vector.load %arg4[%c0_68, %c0_69] : memref<10x128xbf16, #tpu.memory_space<vmem>>, vector<2x128xbf16>
    tpu.vector_store %arg4[%c0_68, %c0_69], %57 {strides = array<i32>} : memref<10x128xbf16, #tpu.memory_space<vmem>>, vector<2x128xbf16>,
    %c1_70 = arith.constant 1 : index
    %c4_71 = arith.constant 4 : index
    %c0_72 = arith.constant 0 : index
    %59 = vector.load %arg0[%c1_70, %c4_71, %c0_72] : memref<2x8x256xbf16, #tpu.memory_space<vmem>>, vector<1x2x128xbf16>
    %60 = vector.shape_cast %59 : vector<1x2x128xbf16> to vector<2x128xbf16>
    %c2_73 = arith.constant 2 : index
    %c0_74 = arith.constant 0 : index
    %61 = vector.load %arg4[%c2_73, %c0_74] : memref<10x128xbf16, #tpu.memory_space<vmem>>, vector<2x128xbf16>
    tpu.vector_store %arg4[%c2_73, %c0_74], %60 {strides = array<i32>} : memref<10x128xbf16, #tpu.memory_space<vmem>>, vector<2x128xbf16>,
    %c0_75 = arith.constant 0 : index
    %c4_76 = arith.constant 4 : index
    %c1_77 = arith.constant 1 : index
    %62 = vector.load %arg0[%c0_75, %c4_76, %c1_77] : memref<2x8x256xbf16, #tpu.memory_space<vmem>>, vector<1x2x128xbf16>
    %63 = vector.shape_cast %62 : vector<1x2x128xbf16> to vector<2x128xbf16>
    %c4_78 = arith.constant 4 : index
    %c0_79 = arith.constant 0 : index
    %64 = vector.load %arg4[%c4_78, %c0_79] : memref<10x128xbf16, #tpu.memory_space<vmem>>, vector<2x128xbf16>
    tpu.vector_store %arg4[%c4_78, %c0_79], %63 {strides = array<i32>} : memref<10x128xbf16, #tpu.memory_space<vmem>>, vector<2x128xbf16>,
    %c1_80 = arith.constant 1 : index
    %c4_81 = arith.constant 4 : index
    %c1_82 = arith.constant 1 : index
    %65 = vector.load %arg0[%c1_80, %c4_81, %c1_82] : memref<2x8x256xbf16, #tpu.memory_space<vmem>>, vector<1x2x128xbf16>
    %66 = vector.shape_cast %65 : vector<1x2x128xbf16> to vector<2x128xbf16>
    %c6_83 = arith.constant 6 : index
    %c0_84 = arith.constant 0 : index
    %67 = vector.load %arg4[%c6_83, %c0_84] : memref<10x128xbf16, #tpu.memory_space<vmem>>, vector<2x128xbf16>
    tpu.vector_store %arg4[%c6_83, %c0_84], %66 {strides = array<i32>} : memref<10x128xbf16, #tpu.memory_space<vmem>>, vector<2x128xbf16>,
    %c0_85 = arith.constant 0 : index
    %c4_86 = arith.constant 4 : index
    %c2_87 = arith.constant 2 : index
    %68 = vector.load %arg0[%c0_85, %c4_86, %c2_87] : memref<2x8x256xbf16, #tpu.memory_space<vmem>>, vector<1x2x128xbf16>
    %69 = vector.shape_cast %68 : vector<1x2x128xbf16> to vector<2x128xbf16>
    %c8_88 = arith.constant 8 : index
    %c0_89 = arith.constant 0 : index
    %70 = vector.load %arg4[%c8_88, %c0_89] : memref<10x128xbf16, #tpu.memory_space<vmem>>, vector<2x128xbf16>
    tpu.vector_store %arg4[%c8_88, %c0_89], %69 {strides = array<i32>} : memref<10x128xbf16, #tpu.memory_space<vmem>>, vector<2x128xbf16>,
    %c4_90 = arith.constant 4 : index
    %c0_91 = arith.constant 0 : index
    %71 = vector.load %arg1[%c4_90, %c0_91] : memref<8x10xbf16, #tpu.memory_space<vmem>>, vector<2x10xbf16>
    %c0_92 = arith.constant 0 : index
    %c0_93 = arith.constant 0 : index
    %72 = vector.load %arg4[%c0_92, %c0_93] : memref<10x128xbf16, #tpu.memory_space<vmem>>, vector<10x128xbf16>
    %cst_94 = arith.constant dense<0.000000e+00> : vector<2x128xf32>
    %73 = tpu.matmul %71, %72, %cst_94 {dimension_numbers = #tpu.dot_dimension_numbers<[1], [0], [0], [1], [0, 0, 1, 1], [], []>} : vector<2x10xbf16>, vector<10x128xbf16>, vector<2x128xf32> -> vector<2x128xf32>
    %c4_95 = arith.constant 4 : index
    %c0_96 = arith.constant 0 : index
    %74 = vector.load %arg2[%c4_95, %c0_96] : memref<8x1xf32, #tpu.memory_space<vmem>>, vector<2x1xf32>
    %75 = vector.broadcast %74 : vector<2x1xf32> to vector<2x128xf32>
    %76 = arith.addf %73, %75 : vector<2x128xf32>
    %cst_97 = arith.constant 0.000000e+00 : f32
    %77 = vector.broadcast %cst_97 : f32 to vector<2x128xf32>
    %78 = arith.cmpf oge, %76, %77 : vector<2x128xf32>
    %cst_98 = arith.constant 2.000000e-01 : f32
    %79 = vector.broadcast %cst_98 : f32 to vector<2x128xf32>
    %80 = arith.mulf %79, %76 : vector<2x128xf32>
    %81 = arith.select %78, %76, %80 : vector<2x128xi1>, vector<2x128xf32>
    %82 = arith.truncf %81 : vector<2x128xf32> to vector<2x128xbf16>
    %c4_99 = arith.constant 4 : index
    %c0_100 = arith.constant 0 : index
    %83 = vector.load %arg3[%c4_99, %c0_100] : memref<8x128xbf16, #tpu.memory_space<vmem>>, vector<2x128xbf16>
    tpu.vector_store %arg3[%c4_99, %c0_100], %82 {strides = array<i32>} : memref<8x128xbf16, #tpu.memory_space<vmem>>, vector<2x128xbf16>,
    %c0_101 = arith.constant 0 : index
    %c6_102 = arith.constant 6 : index
    %c0_103 = arith.constant 0 : index
    %84 = vector.load %arg0[%c0_101, %c6_102, %c0_103] : memref<2x8x256xbf16, #tpu.memory_space<vmem>>, vector<1x2x128xbf16>
    %85 = vector.shape_cast %84 : vector<1x2x128xbf16> to vector<2x128xbf16>
    %c0_104 = arith.constant 0 : index
    %c0_105 = arith.constant 0 : index
    %86 = vector.load %arg4[%c0_104, %c0_105] : memref<10x128xbf16, #tpu.memory_space<vmem>>, vector<2x128xbf16>
    tpu.vector_store %arg4[%c0_104, %c0_105], %85 {strides = array<i32>} : memref<10x128xbf16, #tpu.memory_space<vmem>>, vector<2x128xbf16>,
    %c1_106 = arith.constant 1 : index
    %c6_107 = arith.constant 6 : index
    %c0_108 = arith.constant 0 : index
    %87 = vector.load %arg0[%c1_106, %c6_107, %c0_108] : memref<2x8x256xbf16, #tpu.memory_space<vmem>>, vector<1x2x128xbf16>
    %88 = vector.shape_cast %87 : vector<1x2x128xbf16> to vector<2x128xbf16>
    %c2_109 = arith.constant 2 : index
    %c0_110 = arith.constant 0 : index
    %89 = vector.load %arg4[%c2_109, %c0_110] : memref<10x128xbf16, #tpu.memory_space<vmem>>, vector<2x128xbf16>
    tpu.vector_store %arg4[%c2_109, %c0_110], %88 {strides = array<i32>} : memref<10x128xbf16, #tpu.memory_space<vmem>>, vector<2x128xbf16>,
    %c0_111 = arith.constant 0 : index
    %c6_112 = arith.constant 6 : index
    %c1_113 = arith.constant 1 : index
    %90 = vector.load %arg0[%c0_111, %c6_112, %c1_113] : memref<2x8x256xbf16, #tpu.memory_space<vmem>>, vector<1x2x128xbf16>
    %91 = vector.shape_cast %90 : vector<1x2x128xbf16> to vector<2x128xbf16>
    %c4_114 = arith.constant 4 : index
    %c0_115 = arith.constant 0 : index
    %92 = vector.load %arg4[%c4_114, %c0_115] : memref<10x128xbf16, #tpu.memory_space<vmem>>, vector<2x128xbf16>
    tpu.vector_store %arg4[%c4_114, %c0_115], %91 {strides = array<i32>} : memref<10x128xbf16, #tpu.memory_space<vmem>>, vector<2x128xbf16>,
    %c1_116 = arith.constant 1 : index
    %c6_117 = arith.constant 6 : index
    %c1_118 = arith.constant 1 : index
    %93 = vector.load %arg0[%c1_116, %c6_117, %c1_118] : memref<2x8x256xbf16, #tpu.memory_space<vmem>>, vector<1x2x128xbf16>
    %94 = vector.shape_cast %93 : vector<1x2x128xbf16> to vector<2x128xbf16>
    %c6_119 = arith.constant 6 : index
    %c0_120 = arith.constant 0 : index
    %95 = vector.load %arg4[%c6_119, %c0_120] : memref<10x128xbf16, #tpu.memory_space<vmem>>, vector<2x128xbf16>
    tpu.vector_store %arg4[%c6_119, %c0_120], %94 {strides = array<i32>} : memref<10x128xbf16, #tpu.memory_space<vmem>>, vector<2x128xbf16>,
    %c0_121 = arith.constant 0 : index
    %c6_122 = arith.constant 6 : index
    %c2_123 = arith.constant 2 : index
    %96 = vector.load %arg0[%c0_121, %c6_122, %c2_123] : memref<2x8x256xbf16, #tpu.memory_space<vmem>>, vector<1x2x128xbf16>
    %97 = vector.shape_cast %96 : vector<1x2x128xbf16> to vector<2x128xbf16>
    %c8_124 = arith.constant 8 : index
    %c0_125 = arith.constant 0 : index
    %98 = vector.load %arg4[%c8_124, %c0_125] : memref<10x128xbf16, #tpu.memory_space<vmem>>, vector<2x128xbf16>
    tpu.vector_store %arg4[%c8_124, %c0_125], %97 {strides = array<i32>} : memref<10x128xbf16, #tpu.memory_space<vmem>>, vector<2x128xbf16>,
    %c6_126 = arith.constant 6 : index
    %c0_127 = arith.constant 0 : index
    %99 = vector.load %arg1[%c6_126, %c0_127] : memref<8x10xbf16, #tpu.memory_space<vmem>>, vector<2x10xbf16>
    %c0_128 = arith.constant 0 : index
    %c0_129 = arith.constant 0 : index
    %100 = vector.load %arg4[%c0_128, %c0_129] : memref<10x128xbf16, #tpu.memory_space<vmem>>, vector<10x128xbf16>
    %cst_130 = arith.constant dense<0.000000e+00> : vector<2x128xf32>
    %101 = tpu.matmul %99, %100, %cst_130 {dimension_numbers = #tpu.dot_dimension_numbers<[1], [0], [0], [1], [0, 0, 1, 1], [], []>} : vector<2x10xbf16>, vector<10x128xbf16>, vector<2x128xf32> -> vector<2x128xf32>
    %c6_131 = arith.constant 6 : index
    %c0_132 = arith.constant 0 : index
    %102 = vector.load %arg2[%c6_131, %c0_132] : memref<8x1xf32, #tpu.memory_space<vmem>>, vector<2x1xf32>
    %103 = vector.broadcast %102 : vector<2x1xf32> to vector<2x128xf32>
    %104 = arith.addf %101, %103 : vector<2x128xf32>
    %cst_133 = arith.constant 0.000000e+00 : f32
    %105 = vector.broadcast %cst_133 : f32 to vector<2x128xf32>
    %106 = arith.cmpf oge, %104, %105 : vector<2x128xf32>
    %cst_134 = arith.constant 2.000000e-01 : f32
    %107 = vector.broadcast %cst_134 : f32 to vector<2x128xf32>
    %108 = arith.mulf %107, %104 : vector<2x128xf32>
    %109 = arith.select %106, %104, %108 : vector<2x128xi1>, vector<2x128xf32>
    %110 = arith.truncf %109 : vector<2x128xf32> to vector<2x128xbf16>
    %c6_135 = arith.constant 6 : index
    %c0_136 = arith.constant 0 : index
    %111 = vector.load %arg3[%c6_135, %c0_136] : memref<8x128xbf16, #tpu.memory_space<vmem>>, vector<2x128xbf16>
    tpu.vector_store %arg3[%c6_135, %c0_136], %110 {strides = array<i32>} : memref<8x128xbf16, #tpu.memory_space<vmem>>, vector<2x128xbf16>,
    return
  }
}

module attributes {stable_mosaic.version = 11 : i64} {
  func.func @_conv_vpu_cout1_kernel(%arg0: memref<1x8x256xbf16, #tpu.memory_space<vmem>>, %arg1: memref<8x3xf32, #tpu.memory_space<vmem>>, %arg2: memref<1x1xf32, #tpu.memory_space<vmem>>, %arg3: memref<1x128xbf16, #tpu.memory_space<vmem>>) attributes {dimension_semantics = [], scalar_prefetch = 0 : i64, scratch_operands = 0 : i64, tpu.core_type = #tpu.core_type<tc>} {
    %c0 = arith.constant 0 : index
    %c0_0 = arith.constant 0 : index
    %0 = vector.load %arg1[%c0, %c0_0] : memref<8x3xf32, #tpu.memory_space<vmem>>, vector<8x3xf32>
    %cst = arith.constant 0.000000e+00 : f32
    %1 = vector.broadcast %cst : f32 to vector<8x128xf32>
    %2 = vector.extract_strided_slice %0 {offsets = [0, 0], sizes = [8, 1], strides = [1, 1]} : vector<8x3xf32> to vector<8x1xf32>
    %c0_1 = arith.constant 0 : index
    %c0_2 = arith.constant 0 : index
    %c0_3 = arith.constant 0 : index
    %3 = vector.load %arg0[%c0_1, %c0_2, %c0_3] : memref<1x8x256xbf16, #tpu.memory_space<vmem>>, vector<1x8x128xbf16>
    %4 = vector.shape_cast %3 : vector<1x8x128xbf16> to vector<8x128xbf16>
    %5 = arith.extf %4 : vector<8x128xbf16> to vector<8x128xf32>
    %6 = vector.broadcast %2 : vector<8x1xf32> to vector<8x128xf32>
    %7 = arith.mulf %6, %5 : vector<8x128xf32>
    %8 = arith.addf %1, %7 : vector<8x128xf32>
    %9 = vector.extract_strided_slice %0 {offsets = [0, 1], sizes = [8, 1], strides = [1, 1]} : vector<8x3xf32> to vector<8x1xf32>
    %c0_4 = arith.constant 0 : index
    %c0_5 = arith.constant 0 : index
    %c1 = arith.constant 1 : index
    %10 = vector.load %arg0[%c0_4, %c0_5, %c1] : memref<1x8x256xbf16, #tpu.memory_space<vmem>>, vector<1x8x128xbf16>
    %11 = vector.shape_cast %10 : vector<1x8x128xbf16> to vector<8x128xbf16>
    %12 = arith.extf %11 : vector<8x128xbf16> to vector<8x128xf32>
    %13 = vector.broadcast %9 : vector<8x1xf32> to vector<8x128xf32>
    %14 = arith.mulf %13, %12 : vector<8x128xf32>
    %15 = arith.addf %8, %14 : vector<8x128xf32>
    %16 = vector.extract_strided_slice %0 {offsets = [0, 2], sizes = [8, 1], strides = [1, 1]} : vector<8x3xf32> to vector<8x1xf32>
    %c0_6 = arith.constant 0 : index
    %c0_7 = arith.constant 0 : index
    %c2 = arith.constant 2 : index
    %17 = vector.load %arg0[%c0_6, %c0_7, %c2] : memref<1x8x256xbf16, #tpu.memory_space<vmem>>, vector<1x8x128xbf16>
    %18 = vector.shape_cast %17 : vector<1x8x128xbf16> to vector<8x128xbf16>
    %19 = arith.extf %18 : vector<8x128xbf16> to vector<8x128xf32>
    %20 = vector.broadcast %16 : vector<8x1xf32> to vector<8x128xf32>
    %21 = arith.mulf %20, %19 : vector<8x128xf32>
    %22 = arith.addf %15, %21 : vector<8x128xf32>
    %cst_8 = arith.constant dense<0.000000e+00> : vector<128xf32>
    %23 = vector.multi_reduction <add>, %22, %cst_8 [0] : vector<8x128xf32> to vector<128xf32>
    %24 = vector.shape_cast %23 : vector<128xf32> to vector<1x128xf32>
    %c0_9 = arith.constant 0 : index
    %c0_10 = arith.constant 0 : index
    %25 = vector.load %arg2[%c0_9, %c0_10] : memref<1x1xf32, #tpu.memory_space<vmem>>, vector<1x1xf32>
    %26 = vector.broadcast %25 : vector<1x1xf32> to vector<1x128xf32>
    %27 = arith.addf %24, %26 : vector<1x128xf32>
    %cst_11 = arith.constant 0.000000e+00 : f32
    %28 = vector.broadcast %cst_11 : f32 to vector<1x128xf32>
    %29 = arith.cmpf oge, %27, %28 : vector<1x128xf32>
    %cst_12 = arith.constant 2.000000e-01 : f32
    %30 = vector.broadcast %cst_12 : f32 to vector<1x128xf32>
    %31 = arith.mulf %30, %27 : vector<1x128xf32>
    %32 = arith.select %29, %27, %31 : vector<1x128xi1>, vector<1x128xf32>
    %33 = arith.truncf %32 : vector<1x128xf32> to vector<1x128xbf16>
    %c0_13 = arith.constant 0 : index
    %c0_14 = arith.constant 0 : index
    %34 = vector.load %arg3[%c0_13, %c0_14] : memref<1x128xbf16, #tpu.memory_space<vmem>>, vector<1x128xbf16>
    tpu.vector_store %arg3[%c0_13, %c0_14], %33 {strides = array<i32>} : memref<1x128xbf16, #tpu.memory_space<vmem>>, vector<1x128xbf16>,
    return
  }
}

</mosaic_0001>

<llo_original>
// kernel: a_call__.5
$region0: #{a_call__.5}
  #allocation0 [shape = 'u32[]', space=smem, size = 0x4, offset = 0x4, fixed_abs, tag = 'smem constant byte address 0x4 - core index']
  #allocation1 [shape = 'u32[72,128]{1,0:T(1,128)}', space=vmem, size = 0x9000, scoped, tag = 'internal scratch']
  #allocation2 [shape = 'bf16[10,128]{1,0:T(8,128)(2,1)}', space=vmem, size = 0x1000, scoped, tag = 'scratch operand']
  %s0 = inlined_call_operand.vmem [shape: bf16[2,4,256], index: 0, kind: input, shape index: {}]
  %s1 = inlined_call_operand.vmem [shape: bf16[8,10], index: 1, kind: input, shape index: {}]
  %s2 = inlined_call_operand.vmem [shape: f32[8,1], index: 2, kind: input, shape index: {}]
  %s3 = inlined_call_operand.vmem [shape: bf16[8,128], index: 3, kind: output, shape index: {}]
  %s4 = sld [smem:[#allocation0]]
  $region22: #{a_call__.5} parent=0
    _
  %s6 = ssub.s32 1, %s4
  %s7 = scalar_select 0, %s6, %s4
  // Predicated region
  $region2: #{a_call__.5} parent=0 // pred_check
    _
  $region3: #{a_call__.5} parent=0 // pred_check_branch
    %9 = sbr.rel (0) target = $region5
  $region4: #{a_call__.5} parent=0 // pred_region
    _
  $region5: #{a_call__.5} parent=0 // pred_fallthru
    _
  // Predicated region
  $region6: #{a_call__.5} parent=0 // pred_check
    _
  $region7: #{a_call__.5} parent=0 // pred_check_branch
    %11 = sbr.rel (0) target = $region9
  $region8: #{a_call__.5} parent=0 // pred_region
    _
  $region9: #{a_call__.5} parent=0 // pred_fallthru
    _
  // Predicated region
  $region10: #{a_call__.5} parent=0 // pred_check
    _
  $region11: #{a_call__.5} parent=0 // pred_check_branch
    %13 = sbr.rel (0) target = $region13
  $region12: #{a_call__.5} parent=0 // pred_region
    _
  $region13: #{a_call__.5} parent=0 // pred_fallthru
    _
  %v15 = vld [vmem:[%s0] sm:$0x1]
  %16 = vst [vmem:[#allocation2] sm:$0x1] %v15
  %s17 = scalar_lea.vmem %s0, 4
  %v18 = vld [vmem:[%s17] sm:$0x1]
  %20 = vst [vmem:[#allocation1] ss:$2 sm:$0xff] %v18
  %v21 = vld.sshfl [vmem:[#allocation1] sm:$0xff pattern:$0x75643120]
  %v23 = vrot.slane %v21, 7
  %25 = vst [vmem:[#allocation2] sm:$0x2] %v23
  %v26 = vld [vmem:[%s0] sm:$0x5]
  %s28 = scalar_lea.vmem [#allocation1], 1
  %29 = vst [vmem:[%s28] ss:$2 sm:$0xff] %v26
  %v30 = vld.sshfl [vmem:[#allocation1] sm:$0xff pattern:$0x75643120]
  %32 = vrot.lane.b32.xlu0 %v30, 127
  %v33 = vpop.permute.xlu0 %32
  %v34 = vrot.slane %v33, 4
  %vm35 = vcmask 1039360
  %v36 = vsel %vm35, %v33, %v34
  %38 = vst [vmem:[#allocation2] sm:$0x4] %v36
  %v39 = vld [vmem:[%s17] sm:$0x5]
  %41 = vst [vmem:[#allocation1] ss:$2 sm:$0xff] %v39
  %v42 = vld.sshfl [vmem:[#allocation1] sm:$0xff pattern:$0x75643120]
  %v44 = vrot.slane %v42, 5
  %45 = vrot.lane.b32.xlu0 %v44, 127
  %v46 = vpop.permute.xlu0 %45
  %v47 = vrot.slane %v46, 4
  %v48 = vsel %vm35, %v46, %v47
  %50 = vst [vmem:[#allocation2] sm:$0x8] %v48
  %v51 = vld [vmem:[%s0] sm:$0x5]
  %53 = vst [vmem:[#allocation1] ss:$2 sm:$0xff] %v51
  %v54 = vld.sshfl [vmem:[#allocation1] sm:$0xff pattern:$0x75643120]
  %56 = vrot.lane.b32.xlu0 %v54, 126
  %v57 = vpop.permute.xlu0 %56
  %v58 = vrot.slane %v57, 4
  %vm59 = vcmask 1031168
  %v60 = vsel %vm59, %v57, %v58
  %62 = vst [vmem:[#allocation2 + $0x4] sm:$0x1] %v60
  %v63 = vld [vmem:[%s1] sm:$0x3]
  %v64 = vld [vmem:[#allocation2] sm:$0xf]
  %v65 = vld [vmem:[#allocation2 + $0x4] sm:$0x1]
  %v66 = vld [vmem:[%s2] sm:$0xf]
  %68 = vset.pattern.permute.xlu0 0
  %69 = vperm.xlu0 %68, %v66
  %v70 = vpop.permute.xlu0 %69
  %v74 = vunpack.c.l.b16 %v64
  %v75 = vunpack.c.l.b16 %v65
  %v76 = vpack.c.b16 %v75, %v74
  %vm77 = vcmask 80896
  %v79 = vsel %vm77, %v63, 0
  %vm81 = vcmask 1044480
  %v83 = vsel %vm81, %v76, 0
  %85 = vmatpush.bf16.msra.mxu0 0
  %86 = vmatpush.bf16.msra.mxu0 0
  %87 = vmatpush.bf16.msra.mxu0 0
  %88 = vmatpush.bf16.msra.mxu0 0
  %89 = vmatpush.bf16.msra.mxu0 0
  %90 = vmatpush.bf16.msra.mxu0 0
  %91 = vmatpush.bf16.msra.mxu0 0
  %92 = vmatpush.bf16.msra.mxu0 %v83
  %93 = vmatmul.bf16.gmra.mxu0 %v79
  %v94 = vpop.f32.mrf.mxu0
  %v95 = vadd.f32 %v70, %v94
  %v96 = vpop.f32.mrf.mxu0
  %97 = vdwg.mxu0
  %vm98 = vcmp.ge.f32.partialorder %v95, 0.0
  %v99 = vmul.f32 %v95, 0.2
  %v100 = vsel %vm98, %v95, %v99
  %v101 = vpack.c.bf16 %v100, %v100
  %102 = vst [vmem:[%s3] sm:$0x3] %v101
  %v103 = vld [vmem:[%s0] sm:$0x2]
  %105 = vst [vmem:[#allocation1] ss:$2 sm:$0xff] %v103
  %v106 = vld.sshfl [vmem:[#allocation1] sm:$0xff pattern:$0x75643120]
  %v108 = vrot.slane %v106, 5
  %v109 = vrot.slane %v108, 4
  %111 = vst [vmem:[#allocation2] sm:$0x1] %v109
  %v112 = vld [vmem:[%s17] sm:$0x2]
  %113 = vst [vmem:[#allocation2] sm:$0x2] %v112
  %v114 = vld [vmem:[%s0] sm:$0xa]
  %116 = vst [vmem:[#allocation1] ss:$2 sm:$0xff] %v114
  %v117 = vld.sshfl [vmem:[#allocation1] sm:$0xff pattern:$0x75643120]
  %v119 = vrot.slane %v117, 7
  %120 = vrot.lane.b32.xlu0 %v119, 127
  %v121 = vpop.permute.xlu0 %120
  %v122 = vrot.slane %v121, 4
  %v123 = vsel %vm35, %v121, %v122
  %125 = vst [vmem:[#allocation2] sm:$0x4] %v123
  %v126 = vld [vmem:[%s17] sm:$0xa]
  %s128 = scalar_lea.vmem [#allocation1], 1
  %129 = vst [vmem:[%s128] ss:$2 sm:$0xff] %v126
  %v130 = vld.sshfl [vmem:[#allocation1] sm:$0xff pattern:$0x75643120]
  %132 = vrot.lane.b32.xlu0 %v130, 127
  %v133 = vpop.permute.xlu0 %132
  %v134 = vrot.slane %v133, 4
  %v135 = vsel %vm35, %v133, %v134
  %137 = vst [vmem:[#allocation2] sm:$0x8] %v135
  %v138 = vld [vmem:[%s0] sm:$0xa]
  %140 = vst [vmem:[#allocation1] ss:$2 sm:$0xff] %v138
  %v141 = vld.sshfl [vmem:[#allocation1] sm:$0xff pattern:$0x75643120]
  %v143 = vrot.slane %v141, 5
  %v144 = vrot.slane %v143, 4
  %145 = vrot.lane.b32.xlu0 %v144, 126
  %v146 = vpop.permute.xlu0 %145
  %v147 = vrot.slane %v146, 4
  %v148 = vsel %vm59, %v146, %v147
  %150 = vst [vmem:[#allocation2 + $0x4] sm:$0x1] %v148
  %v151 = vld [vmem:[%s1] sm:$0xc]
  %v152 = vld [vmem:[#allocation2] sm:$0xf]
  %v153 = vld [vmem:[#allocation2 + $0x4] sm:$0x1]
  %v154 = vld [vmem:[%s2 + $0x4] sm:$0xf]
  %156 = vset.pattern.permute.xlu0 0
  %157 = vperm.xlu0 %156, %v154
  %v158 = vpop.permute.xlu0 %157
  %v161 = vunpack.c.l.b16 %v151
  %v162 = vpack.c.b16 %v161, %v161
  %v163 = vrot.slane %v162, 2
  %v166 = vunpack.c.l.b16 %v152
  %v167 = vunpack.c.l.b16 %v153
  %v168 = vpack.c.b16 %v167, %v166
  %v170 = vsel %vm77, %v163, 0
  %v173 = vsel %vm81, %v168, 0
  %175 = vmatpush.bf16.msra.mxu0 0
  %176 = vmatpush.bf16.msra.mxu0 0
  %177 = vmatpush.bf16.msra.mxu0 0
  %178 = vmatpush.bf16.msra.mxu0 0
  %179 = vmatpush.bf16.msra.mxu0 0
  %180 = vmatpush.bf16.msra.mxu0 0
  %181 = vmatpush.bf16.msra.mxu0 0
  %182 = vmatpush.bf16.msra.mxu0 %v173
  %183 = vmatmul.bf16.gmra.mxu0 %v170
  %v184 = vpop.f32.mrf.mxu0
  %v185 = vadd.f32 %v158, %v184
  %v186 = vpop.f32.mrf.mxu0
  %187 = vdwg.mxu0
  %vm188 = vcmp.ge.f32.partialorder %v185, 0.0
  %v189 = vmul.f32 %v185, 0.2
  %v190 = vsel %vm188, %v185, %v189
  %v191 = vpack.c.bf16 %v190, %v190
  %v193 = vrot.slane %v191, 6
  %195 = vst [vmem:[%s3] sm:$0xc] %v193
  // Predicated region
  $region14: #{a_call__.5} parent=0 // pred_check
    _
  $region15: #{a_call__.5} parent=0 // pred_check_branch
    %197 = sbr.rel (0) target = $region17
  $region16: #{a_call__.5} parent=0 // pred_region
    _
  $region17: #{a_call__.5} parent=0 // pred_fallthru
    _
  // Predicated region
  $region18: #{a_call__.5} parent=0 // pred_check
    _
  $region19: #{a_call__.5} parent=0 // pred_check_branch
    %199 = sbr.rel (0) target = $region21
  $region20: #{a_call__.5} parent=0 // pred_region
    _
  $region21: #{a_call__.5} parent=0 // pred_fallthru
    _

// kernel: a_call__.4
$region0: #{a_call__.4}
  #allocation0 [shape = 'u32[]', space=smem, size = 0x4, offset = 0x4, fixed_abs, tag = 'smem constant byte address 0x4 - core index']
  #allocation1 [shape = 'u32[72,128]{1,0:T(1,128)}', space=vmem, size = 0x9000, scoped, tag = 'internal scratch']
  %s0 = inlined_call_operand.vmem [shape: bf16[1,1,384], index: 0, kind: input, shape index: {}]
  %s1 = inlined_call_operand.vmem [shape: f32[4,15], index: 1, kind: input, shape index: {}]
  %s2 = inlined_call_operand.vmem [shape: f32[4,1], index: 2, kind: input, shape index: {}]
  %s3 = inlined_call_operand.vmem [shape: bf16[4,256], index: 3, kind: output, shape index: {}]
  %s4 = sld [smem:[#allocation0]]
  $region22: #{a_call__.4} parent=0
    _
  %s6 = ssub.s32 1, %s4
  %s7 = scalar_select 0, %s6, %s4
  // Predicated region
  $region2: #{a_call__.4} parent=0 // pred_check
    _
  $region3: #{a_call__.4} parent=0 // pred_check_branch
    %9 = sbr.rel (0) target = $region5
  $region4: #{a_call__.4} parent=0 // pred_region
    _
  $region5: #{a_call__.4} parent=0 // pred_fallthru
    _
  // Predicated region
  $region6: #{a_call__.4} parent=0 // pred_check
    _
  $region7: #{a_call__.4} parent=0 // pred_check_branch
    %11 = sbr.rel (0) target = $region9
  $region8: #{a_call__.4} parent=0 // pred_region
    _
  $region9: #{a_call__.4} parent=0 // pred_fallthru
    _
  // Predicated region
  $region10: #{a_call__.4} parent=0 // pred_check
    _
  $region11: #{a_call__.4} parent=0 // pred_check_branch
    %13 = sbr.rel (0) target = $region13
  $region12: #{a_call__.4} parent=0 // pred_region
    _
  $region13: #{a_call__.4} parent=0 // pred_fallthru
    _
  %v14 = vld [vmem:[%s1] sm:$0xf]
  %v15 = vld [vmem:[%s0] sm:$0x3]
  %v16 = vunpack.c.l.bf16 %v15
  %18 = vset.pattern.permute.xlu0 0
  %19 = vperm.xlu0 %18, %v14
  %v20 = vpop.permute.xlu0 %19
  %v23 = vperm.slane %v16, 0
  %v24 = vperm.slane %v16, 2
  %v27 = vperm.slane %v23, 0
  %v28 = vperm.slane %v24, 0
  %v29 = vmul.f32 %v20, %v27
  %v30 = vmul.f32 %v20, %v28
  %v31 = vadd.f32 %v29, 0.0
  %v32 = vadd.f32 %v30, 0.0
  %v33 = vld [vmem:[%s0] sm:$0x7]
  %v34 = vunpack.c.l.bf16 %v33
  %35 = vset.pattern.permute.xlu0 1
  %36 = vperm.xlu0 %35, %v14
  %v37 = vpop.permute.xlu0 %36
  %v40 = vperm.slane %v34, 0
  %v41 = vperm.slane %v34, 2
  %v42 = vperm.slane %v34, 4
  %v46 = vperm.slane %v40, 0
  %v47 = vperm.slane %v41, 0
  %v48 = vperm.slane %v42, 0
  %v49 = vmul.f32 %v37, %v46
  %v50 = vmul.f32 %v37, %v47
  %v51 = vmul.f32 %v37, %v48
  %55 = vrot.lane.b32.xlu0 %v49, 127
  %v56 = vpop.permute.xlu0 %55
  %57 = vrot.lane.b32.xlu0 %v50, 127
  %v58 = vpop.permute.xlu0 %57
  %59 = vrot.lane.b32.xlu0 %v51, 127
  %v60 = vpop.permute.xlu0 %59
  %vm61 = vcmask 1039360
  %v62 = vsel %vm61, %v56, %v58
  %v63 = vsel %vm61, %v58, %v60
  %v66 = vadd.f32 %v31, %v62
  %v67 = vadd.f32 %v32, %v63
  %68 = vset.pattern.permute.xlu0 2
  %69 = vperm.xlu0 %68, %v14
  %v70 = vpop.permute.xlu0 %69
  %v72 = vmul.f32 %v70, %v46
  %v73 = vmul.f32 %v70, %v47
  %v74 = vmul.f32 %v70, %v48
  %78 = vrot.lane.b32.xlu0 %v72, 126
  %v79 = vpop.permute.xlu0 %78
  %80 = vrot.lane.b32.xlu0 %v73, 126
  %v81 = vpop.permute.xlu0 %80
  %82 = vrot.lane.b32.xlu0 %v74, 126
  %v83 = vpop.permute.xlu0 %82
  %vm84 = vcmask 1031168
  %v85 = vsel %vm84, %v79, %v81
  %v86 = vsel %vm84, %v81, %v83
  %v89 = vadd.f32 %v66, %v85
  %v90 = vadd.f32 %v67, %v86
  %91 = vset.pattern.permute.xlu0 3
  %92 = vperm.xlu0 %91, %v14
  %v93 = vpop.permute.xlu0 %92
  %v95 = vmul.f32 %v93, %v46
  %v96 = vmul.f32 %v93, %v47
  %v97 = vmul.f32 %v93, %v48
  %101 = vrot.lane.b32.xlu0 %v95, 125
  %v102 = vpop.permute.xlu0 %101
  %103 = vrot.lane.b32.xlu0 %v96, 125
  %v104 = vpop.permute.xlu0 %103
  %105 = vrot.lane.b32.xlu0 %v97, 125
  %v106 = vpop.permute.xlu0 %105
  %vm107 = vcmask 1022976
  %v108 = vsel %vm107, %v102, %v104
  %v109 = vsel %vm107, %v104, %v106
  %v112 = vadd.f32 %v89, %v108
  %v113 = vadd.f32 %v90, %v109
  %114 = vset.pattern.permute.xlu0 4
  %115 = vperm.xlu0 %114, %v14
  %v116 = vpop.permute.xlu0 %115
  %v118 = vmul.f32 %v116, %v46
  %v119 = vmul.f32 %v116, %v47
  %v120 = vmul.f32 %v116, %v48
  %124 = vrot.lane.b32.xlu0 %v118, 124
  %v125 = vpop.permute.xlu0 %124
  %126 = vrot.lane.b32.xlu0 %v119, 124
  %v127 = vpop.permute.xlu0 %126
  %128 = vrot.lane.b32.xlu0 %v120, 124
  %v129 = vpop.permute.xlu0 %128
  %vm130 = vcmask 1014784
  %v131 = vsel %vm130, %v125, %v127
  %v132 = vsel %vm130, %v127, %v129
  %v135 = vadd.f32 %v112, %v131
  %v136 = vadd.f32 %v113, %v132
  %137 = vset.pattern.permute.xlu0 5
  %138 = vperm.xlu0 %137, %v14
  %v139 = vpop.permute.xlu0 %138
  %v141 = vmul.f32 %v139, %v46
  %v142 = vmul.f32 %v139, %v47
  %v143 = vmul.f32 %v139, %v48
  %147 = vrot.lane.b32.xlu0 %v141, 123
  %v148 = vpop.permute.xlu0 %147
  %149 = vrot.lane.b32.xlu0 %v142, 123
  %v150 = vpop.permute.xlu0 %149
  %151 = vrot.lane.b32.xlu0 %v143, 123
  %v152 = vpop.permute.xlu0 %151
  %vm153 = vcmask 1006592
  %v154 = vsel %vm153, %v148, %v150
  %v155 = vsel %vm153, %v150, %v152
  %v158 = vadd.f32 %v135, %v154
  %v159 = vadd.f32 %v136, %v155
  %160 = vset.pattern.permute.xlu0 6
  %161 = vperm.xlu0 %160, %v14
  %v162 = vpop.permute.xlu0 %161
  %v164 = vmul.f32 %v162, %v46
  %v165 = vmul.f32 %v162, %v47
  %v166 = vmul.f32 %v162, %v48
  %170 = vrot.lane.b32.xlu0 %v164, 122
  %v171 = vpop.permute.xlu0 %170
  %172 = vrot.lane.b32.xlu0 %v165, 122
  %v173 = vpop.permute.xlu0 %172
  %174 = vrot.lane.b32.xlu0 %v166, 122
  %v175 = vpop.permute.xlu0 %174
  %vm176 = vcmask 998400
  %v177 = vsel %vm176, %v171, %v173
  %v178 = vsel %vm176, %v173, %v175
  %v181 = vadd.f32 %v158, %v177
  %v182 = vadd.f32 %v159, %v178
  %183 = vset.pattern.permute.xlu0 7
  %184 = vperm.xlu0 %183, %v14
  %v185 = vpop.permute.xlu0 %184
  %v187 = vmul.f32 %v185, %v46
  %v188 = vmul.f32 %v185, %v47
  %v189 = vmul.f32 %v185, %v48
  %193 = vrot.lane.b32.xlu0 %v187, 121
  %v194 = vpop.permute.xlu0 %193
  %195 = vrot.lane.b32.xlu0 %v188, 121
  %v196 = vpop.permute.xlu0 %195
  %197 = vrot.lane.b32.xlu0 %v189, 121
  %v198 = vpop.permute.xlu0 %197
  %vm199 = vcmask 990208
  %v200 = vsel %vm199, %v194, %v196
  %v201 = vsel %vm199, %v196, %v198
  %v204 = vadd.f32 %v181, %v200
  %v205 = vadd.f32 %v182, %v201
  %206 = vset.pattern.permute.xlu0 8
  %207 = vperm.xlu0 %206, %v14
  %v208 = vpop.permute.xlu0 %207
  %v210 = vmul.f32 %v208, %v46
  %v211 = vmul.f32 %v208, %v47
  %v212 = vmul.f32 %v208, %v48
  %216 = vrot.lane.b32.xlu0 %v210, 120
  %v217 = vpop.permute.xlu0 %216
  %218 = vrot.lane.b32.xlu0 %v211, 120
  %v219 = vpop.permute.xlu0 %218
  %220 = vrot.lane.b32.xlu0 %v212, 120
  %v221 = vpop.permute.xlu0 %220
  %vm222 = vcmask 982016
  %v223 = vsel %vm222, %v217, %v219
  %v224 = vsel %vm222, %v219, %v221
  %v227 = vadd.f32 %v204, %v223
  %v228 = vadd.f32 %v205, %v224
  %229 = vset.pattern.permute.xlu0 9
  %230 = vperm.xlu0 %229, %v14
  %v231 = vpop.permute.xlu0 %230
  %v233 = vmul.f32 %v231, %v46
  %v234 = vmul.f32 %v231, %v47
  %v235 = vmul.f32 %v231, %v48
  %239 = vrot.lane.b32.xlu0 %v233, 119
  %v240 = vpop.permute.xlu0 %239
  %241 = vrot.lane.b32.xlu0 %v234, 119
  %v242 = vpop.permute.xlu0 %241
  %243 = vrot.lane.b32.xlu0 %v235, 119
  %v244 = vpop.permute.xlu0 %243
  %vm245 = vcmask 973824
  %v246 = vsel %vm245, %v240, %v242
  %v247 = vsel %vm245, %v242, %v244
  %v250 = vadd.f32 %v227, %v246
  %v251 = vadd.f32 %v228, %v247
  %252 = vset.pattern.permute.xlu0 10
  %253 = vperm.xlu0 %252, %v14
  %v254 = vpop.permute.xlu0 %253
  %v256 = vmul.f32 %v254, %v46
  %v257 = vmul.f32 %v254, %v47
  %v258 = vmul.f32 %v254, %v48
  %262 = vrot.lane.b32.xlu0 %v256, 118
  %v263 = vpop.permute.xlu0 %262
  %264 = vrot.lane.b32.xlu0 %v257, 118
  %v265 = vpop.permute.xlu0 %264
  %266 = vrot.lane.b32.xlu0 %v258, 118
  %v267 = vpop.permute.xlu0 %266
  %vm268 = vcmask 965632
  %v269 = vsel %vm268, %v263, %v265
  %v270 = vsel %vm268, %v265, %v267
  %v273 = vadd.f32 %v250, %v269
  %v274 = vadd.f32 %v251, %v270
  %275 = vset.pattern.permute.xlu0 11
  %276 = vperm.xlu0 %275, %v14
  %v277 = vpop.permute.xlu0 %276
  %v279 = vmul.f32 %v277, %v46
  %v280 = vmul.f32 %v277, %v47
  %v281 = vmul.f32 %v277, %v48
  %285 = vrot.lane.b32.xlu0 %v279, 117
  %v286 = vpop.permute.xlu0 %285
  %287 = vrot.lane.b32.xlu0 %v280, 117
  %v288 = vpop.permute.xlu0 %287
  %289 = vrot.lane.b32.xlu0 %v281, 117
  %v290 = vpop.permute.xlu0 %289
  %vm291 = vcmask 957440
  %v292 = vsel %vm291, %v286, %v288
  %v293 = vsel %vm291, %v288, %v290
  %v296 = vadd.f32 %v273, %v292
  %v297 = vadd.f32 %v274, %v293
  %298 = vset.pattern.permute.xlu0 12
  %299 = vperm.xlu0 %298, %v14
  %v300 = vpop.permute.xlu0 %299
  %v302 = vmul.f32 %v300, %v46
  %v303 = vmul.f32 %v300, %v47
  %v304 = vmul.f32 %v300, %v48
  %308 = vrot.lane.b32.xlu0 %v302, 116
  %v309 = vpop.permute.xlu0 %308
  %310 = vrot.lane.b32.xlu0 %v303, 116
  %v311 = vpop.permute.xlu0 %310
  %312 = vrot.lane.b32.xlu0 %v304, 116
  %v313 = vpop.permute.xlu0 %312
  %vm314 = vcmask 949248
  %v315 = vsel %vm314, %v309, %v311
  %v316 = vsel %vm314, %v311, %v313
  %v319 = vadd.f32 %v296, %v315
  %v320 = vadd.f32 %v297, %v316
  %321 = vset.pattern.permute.xlu0 13
  %322 = vperm.xlu0 %321, %v14
  %v323 = vpop.permute.xlu0 %322
  %v325 = vmul.f32 %v323, %v46
  %v326 = vmul.f32 %v323, %v47
  %v327 = vmul.f32 %v323, %v48
  %331 = vrot.lane.b32.xlu0 %v325, 115
  %v332 = vpop.permute.xlu0 %331
  %333 = vrot.lane.b32.xlu0 %v326, 115
  %v334 = vpop.permute.xlu0 %333
  %335 = vrot.lane.b32.xlu0 %v327, 115
  %v336 = vpop.permute.xlu0 %335
  %vm337 = vcmask 941056
  %v338 = vsel %vm337, %v332, %v334
  %v339 = vsel %vm337, %v334, %v336
  %v342 = vadd.f32 %v319, %v338
  %v343 = vadd.f32 %v320, %v339
  %344 = vset.pattern.permute.xlu0 14
  %345 = vperm.xlu0 %344, %v14
  %v346 = vpop.permute.xlu0 %345
  %v348 = vmul.f32 %v346, %v46
  %v349 = vmul.f32 %v346, %v47
  %v350 = vmul.f32 %v346, %v48
  %354 = vrot.lane.b32.xlu0 %v348, 114
  %v355 = vpop.permute.xlu0 %354
  %356 = vrot.lane.b32.xlu0 %v349, 114
  %v357 = vpop.permute.xlu0 %356
  %358 = vrot.lane.b32.xlu0 %v350, 114
  %v359 = vpop.permute.xlu0 %358
  %vm360 = vcmask 932864
  %v361 = vsel %vm360, %v355, %v357
  %v362 = vsel %vm360, %v357, %v359
  %v365 = vadd.f32 %v342, %v361
  %v366 = vadd.f32 %v343, %v362
  %v367 = vld [vmem:[%s2] sm:$0xf]
  %369 = vset.pattern.permute.xlu0 0
  %370 = vperm.xlu0 %369, %v367
  %v371 = vpop.permute.xlu0 %370
  %v373 = vadd.f32 %v365, %v371
  %v374 = vadd.f32 %v366, %v371
  %vm375 = vcmp.ge.f32.partialorder %v373, 0.0
  %vm376 = vcmp.ge.f32.partialorder %v374, 0.0
  %v377 = vmul.f32 %v373, 0.2
  %v378 = vmul.f32 %v374, 0.2
  %v379 = vsel %vm375, %v373, %v377
  %v380 = vsel %vm376, %v374, %v378
  %v381 = vpack.c.bf16 %v380, %v379
  %v383 = vrot.slane %v381, 2
  %vm384 = vcmask 1041408
  %v387 = vsel %vm384, %v381, %v383
  %389 = vst [vmem:[%s3] sm:$0xf] %v387
  // Predicated region
  $region14: #{a_call__.4} parent=0 // pred_check
    _
  $region15: #{a_call__.4} parent=0 // pred_check_branch
    %391 = sbr.rel (0) target = $region17
  $region16: #{a_call__.4} parent=0 // pred_region
    _
  $region17: #{a_call__.4} parent=0 // pred_fallthru
    _
  // Predicated region
  $region18: #{a_call__.4} parent=0 // pred_check
    _
  $region19: #{a_call__.4} parent=0 // pred_check_branch
    %393 = sbr.rel (0) target = $region21
  $region20: #{a_call__.4} parent=0 // pred_region
    _
  $region21: #{a_call__.4} parent=0 // pred_fallthru
    _

// kernel: a_call__.6
$region0: #{a_call__.6}
  #allocation0 [shape = 'u32[]', space=smem, size = 0x4, offset = 0x4, fixed_abs, tag = 'smem constant byte address 0x4 - core index']
  #allocation1 [shape = 'u32[72,128]{1,0:T(1,128)}', space=vmem, size = 0x9000, scoped, tag = 'internal scratch']
  #allocation2 [shape = 'bf16[10,128]{1,0:T(8,128)(2,1)}', space=vmem, size = 0x1000, scoped, tag = 'scratch operand']
  %s0 = inlined_call_operand.vmem [shape: bf16[2,8,256], index: 0, kind: input, shape index: {}]
  %s1 = inlined_call_operand.vmem [shape: bf16[8,10], index: 1, kind: input, shape index: {}]
  %s2 = inlined_call_operand.vmem [shape: f32[8,1], index: 2, kind: input, shape index: {}]
  %s3 = inlined_call_operand.vmem [shape: bf16[8,128], index: 3, kind: output, shape index: {}]
  %s4 = sld [smem:[#allocation0]]
  $region22: #{a_call__.6} parent=0
    _
  %s6 = ssub.s32 1, %s4
  %s7 = scalar_select 0, %s6, %s4
  // Predicated region
  $region2: #{a_call__.6} parent=0 // pred_check
    _
  $region3: #{a_call__.6} parent=0 // pred_check_branch
    %9 = sbr.rel (0) target = $region5
  $region4: #{a_call__.6} parent=0 // pred_region
    _
  $region5: #{a_call__.6} parent=0 // pred_fallthru
    _
  // Predicated region
  $region6: #{a_call__.6} parent=0 // pred_check
    _
  $region7: #{a_call__.6} parent=0 // pred_check_branch
    %11 = sbr.rel (0) target = $region9
  $region8: #{a_call__.6} parent=0 // pred_region
    _
  $region9: #{a_call__.6} parent=0 // pred_fallthru
    _
  // Predicated region
  $region10: #{a_call__.6} parent=0 // pred_check
    _
  $region11: #{a_call__.6} parent=0 // pred_check_branch
    %13 = sbr.rel (0) target = $region13
  $region12: #{a_call__.6} parent=0 // pred_region
    _
  $region13: #{a_call__.6} parent=0 // pred_fallthru
    _
  %v15 = vld [vmem:[%s0] sm:$0x1]
  %16 = vst [vmem:[#allocation2] sm:$0x1] %v15
  %s17 = scalar_lea.vmem %s0, 8
  %v18 = vld [vmem:[%s17] sm:$0x1]
  %v20 = vrot.slane %v18, 7
  %22 = vst [vmem:[#allocation2] sm:$0x2] %v20
  %v23 = vld [vmem:[%s0] sm:$0x11]
  %v25 = vrot.slane %v23, 6
  %26 = vrot.lane.b32.xlu0 %v25, 127
  %v27 = vpop.permute.xlu0 %26
  %v28 = vrot.slane %v27, 4
  %vm29 = vcmask 1039360
  %v30 = vsel %vm29, %v27, %v28
  %32 = vst [vmem:[#allocation2] sm:$0x4] %v30
  %v33 = vld [vmem:[%s17] sm:$0x11]
  %v35 = vrot.slane %v33, 5
  %36 = vrot.lane.b32.xlu0 %v35, 127
  %v37 = vpop.permute.xlu0 %36
  %v38 = vrot.slane %v37, 4
  %v39 = vsel %vm29, %v37, %v38
  %41 = vst [vmem:[#allocation2] sm:$0x8] %v39
  %v42 = vld [vmem:[%s0] sm:$0x11]
  %44 = vrot.lane.b32.xlu0 %v42, 126
  %v45 = vpop.permute.xlu0 %44
  %v46 = vrot.slane %v45, 4
  %vm47 = vcmask 1031168
  %v48 = vsel %vm47, %v45, %v46
  %50 = vst [vmem:[#allocation2 + $0x4] sm:$0x1] %v48
  %v51 = vld [vmem:[%s1] sm:$0x1]
  %v52 = vld [vmem:[#allocation2] sm:$0xf]
  %v53 = vld [vmem:[#allocation2 + $0x4] sm:$0x1]
  %v54 = vld [vmem:[%s2] sm:$0x3]
  %56 = vset.pattern.permute.xlu0 0
  %57 = vperm.xlu0 %56, %v54
  %v58 = vpop.permute.xlu0 %57
  %v62 = vunpack.c.l.b16 %v52
  %v63 = vunpack.c.l.b16 %v53
  %v64 = vpack.c.b16 %v63, %v62
  %vm65 = vcmask 80896
  %v67 = vsel %vm65, %v51, 0
  %vm69 = vcmask 1044480
  %v71 = vsel %vm69, %v64, 0
  %73 = vmatpush.bf16.msra.mxu0 0
  %74 = vmatpush.bf16.msra.mxu0 0
  %75 = vmatpush.bf16.msra.mxu0 0
  %76 = vmatpush.bf16.msra.mxu0 0
  %77 = vmatpush.bf16.msra.mxu0 0
  %78 = vmatpush.bf16.msra.mxu0 0
  %79 = vmatpush.bf16.msra.mxu0 0
  %80 = vmatpush.bf16.msra.mxu0 %v71
  %81 = vmatmul.bf16.gmra.mxu0 %v67
  %v82 = vpop.f32.mrf.mxu0
  %v83 = vadd.f32 %v58, %v82
  %v84 = vpop.f32.mrf.mxu0
  %85 = vdwg.mxu0
  %vm86 = vcmp.ge.f32.partialorder %v83, 0.0
  %v87 = vmul.f32 %v83, 0.2
  %v88 = vsel %vm86, %v83, %v87
  %v89 = vpack.c.bf16 %v88, %v88
  %90 = vst [vmem:[%s3] sm:$0x1] %v89
  %v91 = vld [vmem:[%s0] sm:$0x2]
  %v93 = vrot.slane %v91, 5
  %v94 = vrot.slane %v93, 4
  %96 = vst [vmem:[#allocation2] sm:$0x1] %v94
  %v97 = vld [vmem:[%s17] sm:$0x2]
  %98 = vst [vmem:[#allocation2] sm:$0x2] %v97
  %v99 = vld [vmem:[%s0] sm:$0x22]
  %v101 = vrot.slane %v99, 7
  %102 = vrot.lane.b32.xlu0 %v101, 127
  %v103 = vpop.permute.xlu0 %102
  %v104 = vrot.slane %v103, 4
  %v105 = vsel %vm29, %v103, %v104
  %107 = vst [vmem:[#allocation2] sm:$0x4] %v105
  %v108 = vld [vmem:[%s17] sm:$0x22]
  %v110 = vrot.slane %v108, 6
  %111 = vrot.lane.b32.xlu0 %v110, 127
  %v112 = vpop.permute.xlu0 %111
  %v113 = vrot.slane %v112, 4
  %v114 = vsel %vm29, %v112, %v113
  %116 = vst [vmem:[#allocation2] sm:$0x8] %v114
  %v117 = vld [vmem:[%s0] sm:$0x22]
  %v119 = vrot.slane %v117, 5
  %v120 = vrot.slane %v119, 4
  %121 = vrot.lane.b32.xlu0 %v120, 126
  %v122 = vpop.permute.xlu0 %121
  %v123 = vrot.slane %v122, 4
  %v124 = vsel %vm47, %v122, %v123
  %126 = vst [vmem:[#allocation2 + $0x4] sm:$0x1] %v124
  %v127 = vld [vmem:[%s1] sm:$0x2]
  %v128 = vld [vmem:[#allocation2] sm:$0xf]
  %v129 = vld [vmem:[#allocation2 + $0x4] sm:$0x1]
  %v130 = vld [vmem:[%s2 + $0x2] sm:$0x3]
  %132 = vset.pattern.permute.xlu0 0
  %133 = vperm.xlu0 %132, %v130
  %v134 = vpop.permute.xlu0 %133
  %v137 = vunpack.c.l.b16 %v127
  %v138 = vpack.c.b16 %v137, %v137
  %v139 = vrot.slane %v138, 1
  %v142 = vunpack.c.l.b16 %v128
  %v143 = vunpack.c.l.b16 %v129
  %v144 = vpack.c.b16 %v143, %v142
  %v146 = vsel %vm65, %v139, 0
  %v149 = vsel %vm69, %v144, 0
  %151 = vmatpush.bf16.msra.mxu0 0
  %152 = vmatpush.bf16.msra.mxu0 0
  %153 = vmatpush.bf16.msra.mxu0 0
  %154 = vmatpush.bf16.msra.mxu0 0
  %155 = vmatpush.bf16.msra.mxu0 0
  %156 = vmatpush.bf16.msra.mxu0 0
  %157 = vmatpush.bf16.msra.mxu0 0
  %158 = vmatpush.bf16.msra.mxu0 %v149
  %159 = vmatmul.bf16.gmra.mxu0 %v146
  %v160 = vpop.f32.mrf.mxu0
  %v161 = vadd.f32 %v134, %v160
  %v162 = vpop.f32.mrf.mxu0
  %163 = vdwg.mxu0
  %vm164 = vcmp.ge.f32.partialorder %v161, 0.0
  %v165 = vmul.f32 %v161, 0.2
  %v166 = vsel %vm164, %v161, %v165
  %v167 = vpack.c.bf16 %v166, %v166
  %v169 = vrot.slane %v167, 7
  %171 = vst [vmem:[%s3] sm:$0x2] %v169
  %v172 = vld [vmem:[%s0] sm:$0x4]
  %v174 = vrot.slane %v172, 6
  %v175 = vrot.slane %v174, 4
  %177 = vst [vmem:[#allocation2] sm:$0x1] %v175
  %v178 = vld [vmem:[%s17] sm:$0x4]
  %v180 = vrot.slane %v178, 5
  %v181 = vrot.slane %v180, 4
  %183 = vst [vmem:[#allocation2] sm:$0x2] %v181
  %v184 = vld [vmem:[%s0] sm:$0x44]
  %186 = vrot.lane.b32.xlu0 %v184, 127
  %v187 = vpop.permute.xlu0 %186
  %v188 = vrot.slane %v187, 4
  %v189 = vsel %vm29, %v187, %v188
  %191 = vst [vmem:[#allocation2] sm:$0x4] %v189
  %v192 = vld [vmem:[%s17] sm:$0x44]
  %v194 = vrot.slane %v192, 7
  %195 = vrot.lane.b32.xlu0 %v194, 127
  %v196 = vpop.permute.xlu0 %195
  %v197 = vrot.slane %v196, 4
  %v198 = vsel %vm29, %v196, %v197
  %200 = vst [vmem:[#allocation2] sm:$0x8] %v198
  %v201 = vld [vmem:[%s0] sm:$0x44]
  %v203 = vrot.slane %v201, 6
  %v204 = vrot.slane %v203, 4
  %205 = vrot.lane.b32.xlu0 %v204, 126
  %v206 = vpop.permute.xlu0 %205
  %v207 = vrot.slane %v206, 4
  %v208 = vsel %vm47, %v206, %v207
  %210 = vst [vmem:[#allocation2 + $0x4] sm:$0x1] %v208
  %v211 = vld [vmem:[%s1] sm:$0x4]
  %v212 = vld [vmem:[#allocation2] sm:$0xf]
  %v213 = vld [vmem:[#allocation2 + $0x4] sm:$0x1]
  %v214 = vld [vmem:[%s2 + $0x4] sm:$0x3]
  %216 = vset.pattern.permute.xlu0 0
  %217 = vperm.xlu0 %216, %v214
  %v218 = vpop.permute.xlu0 %217
  %v221 = vunpack.c.l.b16 %v211
  %v222 = vpack.c.b16 %v221, %v221
  %v223 = vrot.slane %v222, 2
  %v226 = vunpack.c.l.b16 %v212
  %v227 = vunpack.c.l.b16 %v213
  %v228 = vpack.c.b16 %v227, %v226
  %v230 = vsel %vm65, %v223, 0
  %v233 = vsel %vm69, %v228, 0
  %235 = vmatpush.bf16.msra.mxu0 0
  %236 = vmatpush.bf16.msra.mxu0 0
  %237 = vmatpush.bf16.msra.mxu0 0
  %238 = vmatpush.bf16.msra.mxu0 0
  %239 = vmatpush.bf16.msra.mxu0 0
  %240 = vmatpush.bf16.msra.mxu0 0
  %241 = vmatpush.bf16.msra.mxu0 0
  %242 = vmatpush.bf16.msra.mxu0 %v233
  %243 = vmatmul.bf16.gmra.mxu0 %v230
  %v244 = vpop.f32.mrf.mxu0
  %v245 = vadd.f32 %v218, %v244
  %v246 = vpop.f32.mrf.mxu0
  %247 = vdwg.mxu0
  %vm248 = vcmp.ge.f32.partialorder %v245, 0.0
  %v249 = vmul.f32 %v245, 0.2
  %v250 = vsel %vm248, %v245, %v249
  %v251 = vpack.c.bf16 %v250, %v250
  %v253 = vrot.slane %v251, 6
  %255 = vst [vmem:[%s3] sm:$0x4] %v253
  %v256 = vld [vmem:[%s0] sm:$0x8]
  %v258 = vrot.slane %v256, 7
  %v259 = vrot.slane %v258, 4
  %261 = vst [vmem:[#allocation2] sm:$0x1] %v259
  %v262 = vld [vmem:[%s17] sm:$0x8]
  %v264 = vrot.slane %v262, 6
  %v265 = vrot.slane %v264, 4
  %267 = vst [vmem:[#allocation2] sm:$0x2] %v265
  %v268 = vld [vmem:[%s0] sm:$0x88]
  %v270 = vrot.slane %v268, 5
  %v271 = vrot.slane %v270, 4
  %272 = vrot.lane.b32.xlu0 %v271, 127
  %v273 = vpop.permute.xlu0 %272
  %v274 = vrot.slane %v273, 4
  %v275 = vsel %vm29, %v273, %v274
  %277 = vst [vmem:[#allocation2] sm:$0x4] %v275
  %v278 = vld [vmem:[%s17] sm:$0x88]
  %280 = vrot.lane.b32.xlu0 %v278, 127
  %v281 = vpop.permute.xlu0 %280
  %v282 = vrot.slane %v281, 4
  %v283 = vsel %vm29, %v281, %v282
  %285 = vst [vmem:[#allocation2] sm:$0x8] %v283
  %v286 = vld [vmem:[%s0] sm:$0x88]
  %v288 = vrot.slane %v286, 7
  %v289 = vrot.slane %v288, 4
  %290 = vrot.lane.b32.xlu0 %v289, 126
  %v291 = vpop.permute.xlu0 %290
  %v292 = vrot.slane %v291, 4
  %v293 = vsel %vm47, %v291, %v292
  %295 = vst [vmem:[#allocation2 + $0x4] sm:$0x1] %v293
  %v296 = vld [vmem:[%s1] sm:$0x8]
  %v297 = vld [vmem:[#allocation2] sm:$0xf]
  %v298 = vld [vmem:[#allocation2 + $0x4] sm:$0x1]
  %v299 = vld [vmem:[%s2 + $0x6] sm:$0x3]
  %301 = vset.pattern.permute.xlu0 0
  %302 = vperm.xlu0 %301, %v299
  %v303 = vpop.permute.xlu0 %302
  %v306 = vunpack.c.l.b16 %v296
  %v307 = vpack.c.b16 %v306, %v306
  %v308 = vrot.slane %v307, 3
  %v311 = vunpack.c.l.b16 %v297
  %v312 = vunpack.c.l.b16 %v298
  %v313 = vpack.c.b16 %v312, %v311
  %v315 = vsel %vm65, %v308, 0
  %v318 = vsel %vm69, %v313, 0
  %320 = vmatpush.bf16.msra.mxu0 0
  %321 = vmatpush.bf16.msra.mxu0 0
  %322 = vmatpush.bf16.msra.mxu0 0
  %323 = vmatpush.bf16.msra.mxu0 0
  %324 = vmatpush.bf16.msra.mxu0 0
  %325 = vmatpush.bf16.msra.mxu0 0
  %326 = vmatpush.bf16.msra.mxu0 0
  %327 = vmatpush.bf16.msra.mxu0 %v318
  %328 = vmatmul.bf16.gmra.mxu0 %v315
  %v329 = vpop.f32.mrf.mxu0
  %v330 = vadd.f32 %v303, %v329
  %v331 = vpop.f32.mrf.mxu0
  %332 = vdwg.mxu0
  %vm333 = vcmp.ge.f32.partialorder %v330, 0.0
  %v334 = vmul.f32 %v330, 0.2
  %v335 = vsel %vm333, %v330, %v334
  %v336 = vpack.c.bf16 %v335, %v335
  %v338 = vrot.slane %v336, 5
  %340 = vst [vmem:[%s3] sm:$0x8] %v338
  // Predicated region
  $region14: #{a_call__.6} parent=0 // pred_check
    _
  $region15: #{a_call__.6} parent=0 // pred_check_branch
    %342 = sbr.rel (0) target = $region17
  $region16: #{a_call__.6} parent=0 // pred_region
    _
  $region17: #{a_call__.6} parent=0 // pred_fallthru
    _
  // Predicated region
  $region18: #{a_call__.6} parent=0 // pred_check
    _
  $region19: #{a_call__.6} parent=0 // pred_check_branch
    %344 = sbr.rel (0) target = $region21
  $region20: #{a_call__.6} parent=0 // pred_region
    _
  $region21: #{a_call__.6} parent=0 // pred_fallthru
    _

// kernel: a_call__.7
$region0: #{a_call__.7}
  #allocation0 [shape = 'u32[]', space=smem, size = 0x4, offset = 0x4, fixed_abs, tag = 'smem constant byte address 0x4 - core index']
  #allocation1 [shape = 'u32[72,128]{1,0:T(1,128)}', space=vmem, size = 0x9000, scoped, tag = 'internal scratch']
  #allocation2 [shape = 'f32[1,1]{1,0:T(1,128)S(1)}', space=vmem, size = 0x200, scoped, tag = 'scoped memory for a_call__.7']
  %s0 = inlined_call_operand.vmem [shape: bf16[1,8,256], index: 0, kind: input, shape index: {}]
  %s1 = inlined_call_operand.vmem [shape: f32[8,3], index: 1, kind: input, shape index: {}]
  %s2 = inlined_call_operand.<no memory space> [shape: f32[1,1], index: 2, kind: input, shape index: {}]
  %s3 = inlined_call_operand.vmem [shape: bf16[1,128], index: 3, kind: output, shape index: {}]
  %s4 = sld [smem:[#allocation0]]
  $region22: #{a_call__.7} parent=0
    _
  %s6 = ssub.s32 1, %s4
  %s7 = scalar_select 0, %s6, %s4
  %v8 = vstv %s2
  %9 = vst [vmem:[#allocation2] sm:$0x1] %v8
  // Predicated region
  $region2: #{a_call__.7} parent=0 // pred_check
    _
  $region3: #{a_call__.7} parent=0 // pred_check_branch
    %11 = sbr.rel (0) target = $region5
  $region4: #{a_call__.7} parent=0 // pred_region
    _
  $region5: #{a_call__.7} parent=0 // pred_fallthru
    _
  // Predicated region
  $region6: #{a_call__.7} parent=0 // pred_check
    _
  $region7: #{a_call__.7} parent=0 // pred_check_branch
    %13 = sbr.rel (0) target = $region9
  $region8: #{a_call__.7} parent=0 // pred_region
    _
  $region9: #{a_call__.7} parent=0 // pred_fallthru
    _
  // Predicated region
  $region10: #{a_call__.7} parent=0 // pred_check
    _
  $region11: #{a_call__.7} parent=0 // pred_check_branch
    %15 = sbr.rel (0) target = $region13
  $region12: #{a_call__.7} parent=0 // pred_region
    _
  $region13: #{a_call__.7} parent=0 // pred_fallthru
    _
  %v16 = vld [vmem:[%s1] sm:$0xff]
  %v17 = vld [vmem:[%s0] sm:$0xf]
  %v18 = vunpack.c.l.bf16 %v17
  %20 = vset.pattern.permute.xlu0 0
  %21 = vperm.xlu0 %20, %v16
  %v22 = vpop.permute.xlu0 %21
  %v24 = vmul.f32 %v22, %v18
  %v25 = vadd.f32 %v24, 0.0
  %v26 = vld [vmem:[%s0] sm:$0xff]
  %v27 = vunpack.c.l.bf16 %v26
  %v28 = vunpack.c.h.bf16 %v26
  %29 = vset.pattern.permute.xlu0 1
  %30 = vperm.xlu0 %29, %v16
  %v31 = vpop.permute.xlu0 %30
  %v33 = vmul.f32 %v31, %v27
  %v34 = vmul.f32 %v31, %v28
  %37 = vrot.lane.b32.xlu0 %v33, 127
  %v38 = vpop.permute.xlu0 %37
  %39 = vrot.lane.b32.xlu0 %v34, 127
  %v40 = vpop.permute.xlu0 %39
  %vm41 = vcmask 1039360
  %v42 = vsel %vm41, %v38, %v40
  %v44 = vadd.f32 %v25, %v42
  %45 = vset.pattern.permute.xlu0 2
  %46 = vperm.xlu0 %45, %v16
  %v47 = vpop.permute.xlu0 %46
  %v49 = vmul.f32 %v47, %v27
  %v50 = vmul.f32 %v47, %v28
  %53 = vrot.lane.b32.xlu0 %v49, 126
  %v54 = vpop.permute.xlu0 %53
  %55 = vrot.lane.b32.xlu0 %v50, 126
  %v56 = vpop.permute.xlu0 %55
  %vm57 = vcmask 1031168
  %v58 = vsel %vm57, %v54, %v56
  %v60 = vadd.f32 %v44, %v58
  %v61 = vrot.slane %v60, 4
  %v62 = vadd.f32 %v60, %v61
  %v63 = vrot.slane %v62, 2
  %v64 = vadd.f32 %v62, %v63
  %v65 = vrot.slane %v64, 1
  %v66 = vadd.f32 %v64, %v65
  %v67 = vld [vmem:[#allocation2] sm:$0x1]
  %69 = vset.pattern.permute.xlu0 0
  %70 = vperm.xlu0 %69, %v67
  %v71 = vpop.permute.xlu0 %70
  %v73 = vperm.slane %v71, 0
  %v74 = vadd.f32 %v66, %v73
  %vm75 = vcmp.ge.f32.partialorder %v74, 0.0
  %v76 = vmul.f32 %v74, 0.2
  %v77 = vsel %vm75, %v74, %v76
  %v78 = vpack.c.bf16 %v77, %v77
  %vm79 = vcmask 1040384
  %vm80 = vsmask.f32 256
  %vm81 = vmand %vm79, %vm80
  %v82 = vld [vmem:[%s3] sm:$0x1]
  %v83 = vsel %vm81, %v78, %v82
  %84 = vst [vmem:[%s3] sm:$0x1] %v83
  // Predicated region
  $region14: #{a_call__.7} parent=0 // pred_check
    _
  $region15: #{a_call__.7} parent=0 // pred_check_branch
    %86 = sbr.rel (0) target = $region17
  $region16: #{a_call__.7} parent=0 // pred_region
    _
  $region17: #{a_call__.7} parent=0 // pred_fallthru
    _
  // Predicated region
  $region18: #{a_call__.7} parent=0 // pred_check
    _
  $region19: #{a_call__.7} parent=0 // pred_check_branch
    %88 = sbr.rel (0) target = $region21
  $region20: #{a_call__.7} parent=0 // pred_region
    _
  $region21: #{a_call__.7} parent=0 // pred_fallthru
    _

</llo_original>
